<compile_context>
chip_gen: v7x
topology: tpu7x:2x2x1
jax: 0.10.0
libtpu: 0.0.40
codegen_flags: <defaults>
</compile_context>

<pallas_src>
import jax
import jax.numpy as jnp
from jax.experimental import pallas as pl
from jax.experimental.pallas import tpu as pltpu

LEAK = 0.2
_LANE = 128
_VMEM_BUDGET = 20 * 1024 * 1024  # conservative: fits v7x 64 MiB phys / 32 MiB scoped


def _leaky(x):
    return jnp.where(x > 0, x, LEAK * x)


# ---------------- Pallas kernels (matmul + bias + act (+ residual add)) -----


def conv_mm_kernel(p_ref, w_ref, b_ref, o_ref):
    acc = jnp.dot(p_ref[...], w_ref[...], preferred_element_type=jnp.float32)
    acc = acc + b_ref[...]
    o_ref[...] = _leaky(acc).astype(o_ref.dtype)


def conv_mm_add_kernel(p_ref, w_ref, b_ref, s_ref, o_ref):
    acc = jnp.dot(p_ref[...], w_ref[...], preferred_element_type=jnp.float32)
    acc = acc + b_ref[...]
    o_ref[...] = (_leaky(acc) + s_ref[...].astype(jnp.float32)).astype(o_ref.dtype)


# ---------------- tiling / pallas_call wrapper -------------------------------


def _pick_tm(M, K, cout_pad, has_skip, in_itemsize):
    """Largest row tile whose (double-buffered) footprint fits the VMEM budget,
    preferring a grid with >= 2 steps (megacore on v7x)."""
    resident = 2 * (K * cout_pad * in_itemsize + cout_pad * 4)  # weight + bias blocks
    for tm in (1024, 512, 256, 128):
        per_step = tm * K * in_itemsize + tm * cout_pad * 4
        if has_skip:
            per_step += tm * cout_pad * 4
        if 2 * per_step + resident > _VMEM_BUDGET:
            continue
        if pl.cdiv(M, tm) >= 2 or tm == 128:
            return tm
    return 128


def _conv_matmul(patches, w2d, bias_row, skip=None, out_dtype=jnp.float32):
    """patches: (M, K) compute dtype, w2d: (K, Cp), bias_row: (1, Cp) f32,
    skip: (M, Cp) f32 or None.  Returns (M, Cp) in out_dtype."""
    M, K = patches.shape
    Cp = w2d.shape[1]
    w2d = w2d.astype(patches.dtype)

    tm = _pick_tm(M, K, Cp, skip is not None, jnp.dtype(patches.dtype).itemsize)
    n_steps = pl.cdiv(M, tm)
    Mp = n_steps * tm
    if Mp != M:  # padded cdiv grid (replaces the old tm = M fallback)
        patches = jnp.pad(patches, ((0, Mp - M), (0, 0)))
        if skip is not None:
            skip = jnp.pad(skip, ((0, Mp - M), (0, 0)))

    in_specs = [
        pl.BlockSpec((tm, K), lambda i: (i, 0)),
        pl.BlockSpec((K, Cp), lambda i: (0, 0)),
        pl.BlockSpec((1, Cp), lambda i: (0, 0)),
    ]
    args = [patches, w2d, bias_row]
    kernel = conv_mm_kernel
    if skip is not None:
        in_specs.append(pl.BlockSpec((tm, Cp), lambda i: (i, 0)))
        args.append(skip)
        kernel = conv_mm_add_kernel

    bytes_accessed = sum(int(a.size) * a.dtype.itemsize for a in args)
    bytes_accessed += Mp * Cp * jnp.dtype(out_dtype).itemsize
    cost = pl.CostEstimate(flops=2 * Mp * K * Cp, transcendentals=0,
                           bytes_accessed=bytes_accessed)

    out = pl.pallas_call(
        kernel,
        out_shape=jax.ShapeDtypeStruct((Mp, Cp), out_dtype),
        grid=(n_steps,),
        in_specs=in_specs,
        out_specs=pl.BlockSpec((tm, Cp), lambda i: (i, 0)),
        compiler_params=pltpu.CompilerParams(
            dimension_semantics=("parallel",),
            vmem_limit_bytes=32 * 1024 * 1024),
        cost_estimate=cost,
    )(*args)
    return out[:M]


# ---------------- JAX glue: im2col, weight/bias packing, forward -------------


def _im2col(x_nhwc, stride):
    """3x3 kernel, pad=1, given stride. Returns (N*Hout*Wout, 9*C), Hout, Wout."""
    N, H, W, C = x_nhwc.shape
    xp = jnp.pad(x_nhwc, ((0, 0), (1, 1), (1, 1), (0, 0)))
    Hout = (H + 2 - 3) // stride + 1
    Wout = (W + 2 - 3) // stride + 1
    cols = []
    for kh in range(3):
        for kw in range(3):
            cols.append(
                xp[:, kh:kh + stride * (Hout - 1) + 1:stride,
                      kw:kw + stride * (Wout - 1) + 1:stride, :]
            )
    patches = jnp.stack(cols, axis=3)  # (N, Hout, Wout, 9, C)
    return patches.reshape(N * Hout * Wout, 9 * C), Hout, Wout


def _w2d(w_oihw, cout_pad):
    """(Cout, Cin, 3, 3) -> (9*Cin, cout_pad), (kh, kw, cin) patch ordering."""
    cout = w_oihw.shape[0]
    w = jnp.transpose(w_oihw, (2, 3, 1, 0)).reshape(-1, cout)
    if cout != cout_pad:
        w = jnp.pad(w, ((0, 0), (0, cout_pad - cout)))
    return w


def _bias_row(b, cout_pad):
    b = b.reshape(1, -1).astype(jnp.float32)
    if b.shape[1] != cout_pad:
        b = jnp.pad(b, ((0, 0), (0, cout_pad - b.shape[1])))
    return b


def block_d_forward(x_nchw, params, compute_dtype=jnp.bfloat16):
    x = jnp.transpose(x_nchw, (0, 2, 3, 1)).astype(compute_dtype)  # NHWC, bf16
    N, H, W, Cin = x.shape
    Cout = params["conv1_w"].shape[0]
    Cout_pad = pl.cdiv(Cout, _LANE) * _LANE  # lane-dense output blocks

    # Stride-1 patches of x (shared by Conv1 and, via stride-2 selection, Skip).
    p1, H1, W1 = _im2col(x, 1)
    K1 = p1.shape[1]

    # Skip branch: stride-2 spatial subset of the same patches (no 2nd im2col).
    Hs, Ws = (H - 1) // 2 + 1, (W - 1) // 2 + 1
    p_skip = p1.reshape(N, H1, W1, K1)[:, ::2, ::2, :].reshape(N * Hs * Ws, K1)
    y_skip = _conv_matmul(p_skip, _w2d(params["skip_w"], Cout_pad),
                          _bias_row(params["skip_b"], Cout_pad),
                          out_dtype=jnp.float32)

    # Main branch: Conv1 (stride 1) -> LeakyReLU, kept in bf16.
    h1 = _conv_matmul(p1, _w2d(params["conv1_w"], Cout_pad),
                      _bias_row(params["conv1_b"], Cout_pad),
                      out_dtype=compute_dtype)
    h1 = h1[:, :Cout].reshape(N, H1, W1, Cout)

    # Conv2 (stride 2) -> LeakyReLU, fused residual add with the skip branch.
    p2, H2, W2 = _im2col(h1, 2)
    out = _conv_matmul(p2, _w2d(params["conv2_w"], Cout_pad),
                       _bias_row(params["conv2_b"], Cout_pad),
                       skip=y_skip, out_dtype=jnp.float32)
    out = out[:, :Cout].reshape(N, H2, W2, Cout)
    return jnp.transpose(out, (0, 3, 1, 2))  # back to NCHW


# ---------------- deterministic parameter init (xavier_normal / zeros) -------


def init_params(key, in_ch, out_ch):
    def xavier_normal(k, shape):  # shape = (Cout, Cin, kh, kw)
        fan_in = shape[1] * shape[2] * shape[3]
        fan_out = shape[0] * shape[2] * shape[3]
        std = (2.0 / (fan_in + fan_out)) ** 0.5
        return std * jax.random.normal(k, shape, jnp.float32)

    k1, k2, k3 = jax.random.split(key, 3)
    return {
        "conv1_w": xavier_normal(k1, (out_ch, in_ch, 3, 3)),
        "conv1_b": jnp.zeros((out_ch,), jnp.float32),
        "conv2_w": xavier_normal(k2, (out_ch, out_ch, 3, 3)),
        "conv2_b": jnp.zeros((out_ch,), jnp.float32),
        "skip_w": xavier_normal(k3, (out_ch, in_ch, 3, 3)),
        "skip_b": jnp.zeros((out_ch,), jnp.float32),
    }


# ---------------- references for correctness checks --------------------------


def _ref_conv(x, w, b, stride, compute_dtype):
    out = jax.lax.conv_general_dilated(
        x.astype(compute_dtype), w.astype(compute_dtype),
        (stride, stride), ((1, 1), (1, 1)),
        dimension_numbers=("NCHW", "OIHW", "NCHW"),
        preferred_element_type=jnp.float32)
    return out + b[None, :, None, None]


def block_d_reference(x, params, compute_dtype=jnp.float32):
    y = _leaky(_ref_conv(x, params["skip_w"], params["skip_b"], 2, compute_dtype))
    h = _leaky(_ref_conv(x, params["conv1_w"], params["conv1_b"], 1, compute_dtype))
    h = h.astype(compute_dtype)  # kernel stores h1 in the compute dtype
    h = _leaky(_ref_conv(h, params["conv2_w"], params["conv2_b"], 2, compute_dtype))
    return h + y


if __name__ == "__main__":
    key = jax.random.PRNGKey(0)
    k_x, k_p = jax.random.split(key)

    # small shapes consistent with the module: res_in=16 -> res_out=8
    N, Cin, Cout, H, W = 2, 4, 8, 16, 16
    x = jax.random.normal(k_x, (N, Cin, H, W), jnp.float32)
    params = init_params(k_p, Cin, Cout)

    fwd = jax.jit(block_d_forward)
    out = jax.block_until_ready(fwd(x, params))
    assert out.shape == (N, Cout, H // 2, W // 2), out.shape

    # Precision-matched reference (same bf16 input rounding, f32 accumulation).
    ref_bf16 = block_d_reference(x, params, compute_dtype=jnp.bfloat16)
    assert jnp.allclose(out, ref_bf16, atol=1e-2, rtol=1e-2), (
        float(jnp.max(jnp.abs(out - ref_bf16))))

    # Sanity vs the pure-f32 module semantics (loose: bf16 matmul inputs).
    ref_f32 = block_d_reference(x, params, compute_dtype=jnp.float32)
    assert jnp.allclose(out, ref_f32, atol=0.15, rtol=0.1), (
        float(jnp.max(jnp.abs(out - ref_f32))))

    print("KERNEL_OK")
</pallas_src>

<mosaic_0001>
module attributes {stable_mosaic.version = 11 : i64} {
  func.func @conv_mm_kernel(%arg0: i32, %arg1: memref<128x36xbf16, #tpu.memory_space<vmem>>, %arg2: memref<36x128xbf16, #tpu.memory_space<vmem>>, %arg3: memref<1x128xf32, #tpu.memory_space<vmem>>, %arg4: memref<128x128xf32, #tpu.memory_space<vmem>>) attributes {dimension_semantics = [#tpu.dimension_semantics<parallel>], iteration_bounds = array<i64: 1>, scalar_prefetch = 0 : i64, scratch_operands = 0 : i64, tpu.core_type = #tpu.core_type<tc>, window_params = [{transform_indices = @transform_0, window_bounds = array<i64: 128, 36>}, {pipeline_mode = #tpu.pipeline_mode<synchronous>, transform_indices = @transform_1, window_bounds = array<i64: 36, 128>}, {pipeline_mode = #tpu.pipeline_mode<synchronous>, transform_indices = @transform_2, window_bounds = array<i64: 1, 128>}, {transform_indices = @transform_3, window_bounds = array<i64: 128, 128>}]} {
    %c0 = arith.constant 0 : index
    %c0_0 = arith.constant 0 : index
    %0 = vector.load %arg1[%c0, %c0_0] : memref<128x36xbf16, #tpu.memory_space<vmem>>, vector<128x36xbf16>
    %c0_1 = arith.constant 0 : index
    %c0_2 = arith.constant 0 : index
    %1 = vector.load %arg2[%c0_1, %c0_2] : memref<36x128xbf16, #tpu.memory_space<vmem>>, vector<36x128xbf16>
    %cst = arith.constant dense<0.000000e+00> : vector<128x128xf32>
    %2 = tpu.matmul %0, %1, %cst {dimension_numbers = #tpu.dot_dimension_numbers<[1], [0], [0], [1], [0, 0, 1, 1], [], []>} : vector<128x36xbf16>, vector<36x128xbf16>, vector<128x128xf32> -> vector<128x128xf32>
    %c0_3 = arith.constant 0 : index
    %c0_4 = arith.constant 0 : index
    %3 = vector.load %arg3[%c0_3, %c0_4] : memref<1x128xf32, #tpu.memory_space<vmem>>, vector<1x128xf32>
    %4 = vector.broadcast %3 : vector<1x128xf32> to vector<128x128xf32>
    %5 = arith.addf %2, %4 : vector<128x128xf32>
    %cst_5 = arith.constant 0.000000e+00 : f32
    %6 = vector.broadcast %cst_5 : f32 to vector<128x128xf32>
    %7 = arith.cmpf ogt, %5, %6 : vector<128x128xf32>
    %cst_6 = arith.constant 2.000000e-01 : f32
    %8 = vector.broadcast %cst_6 : f32 to vector<128x128xf32>
    %9 = arith.mulf %8, %5 : vector<128x128xf32>
    %10 = arith.select %7, %5, %9 : vector<128x128xi1>, vector<128x128xf32>
    %c0_7 = arith.constant 0 : index
    %c0_8 = arith.constant 0 : index
    %11 = vector.load %arg4[%c0_7, %c0_8] : memref<128x128xf32, #tpu.memory_space<vmem>>, vector<128x128xf32>
    tpu.vector_store %arg4[%c0_7, %c0_8], %10 {strides = array<i32>} : memref<128x128xf32, #tpu.memory_space<vmem>>, vector<128x128xf32>,
    return
  }
  func.func @transform_0(%arg0: i32) -> (i32, i32) {
    %c0_i32 = arith.constant 0 : i32
    %c0_i32_0 = arith.constant 0 : i32
    return %arg0, %c0_i32 : i32, i32
  }
  func.func @transform_1(%arg0: i32) -> (i32, i32) {
    %c0_i32 = arith.constant 0 : i32
    %c0_i32_0 = arith.constant 0 : i32
    %c0_i32_1 = arith.constant 0 : i32
    return %c0_i32, %c0_i32_0 : i32, i32
  }
  func.func @transform_2(%arg0: i32) -> (i32, i32) {
    %c0_i32 = arith.constant 0 : i32
    %c0_i32_0 = arith.constant 0 : i32
    %c0_i32_1 = arith.constant 0 : i32
    return %c0_i32, %c0_i32_0 : i32, i32
  }
  func.func @transform_3(%arg0: i32) -> (i32, i32) {
    %c0_i32 = arith.constant 0 : i32
    %c0_i32_0 = arith.constant 0 : i32
    return %arg0, %c0_i32 : i32, i32
  }
}

module attributes {stable_mosaic.version = 11 : i64} {
  func.func @conv_mm_kernel(%arg0: i32, %arg1: memref<256x36xbf16, #tpu.memory_space<vmem>>, %arg2: memref<36x128xbf16, #tpu.memory_space<vmem>>, %arg3: memref<1x128xf32, #tpu.memory_space<vmem>>, %arg4: memref<256x128xbf16, #tpu.memory_space<vmem>>) attributes {dimension_semantics = [#tpu.dimension_semantics<parallel>], iteration_bounds = array<i64: 2>, scalar_prefetch = 0 : i64, scratch_operands = 0 : i64, tpu.core_type = #tpu.core_type<tc>, window_params = [{transform_indices = @transform_0, window_bounds = array<i64: 256, 36>}, {pipeline_mode = #tpu.pipeline_mode<synchronous>, transform_indices = @transform_1, window_bounds = array<i64: 36, 128>}, {pipeline_mode = #tpu.pipeline_mode<synchronous>, transform_indices = @transform_2, window_bounds = array<i64: 1, 128>}, {transform_indices = @transform_3, window_bounds = array<i64: 256, 128>}]} {
    %c0 = arith.constant 0 : index
    %c0_0 = arith.constant 0 : index
    %0 = vector.load %arg1[%c0, %c0_0] : memref<256x36xbf16, #tpu.memory_space<vmem>>, vector<256x36xbf16>
    %c0_1 = arith.constant 0 : index
    %c0_2 = arith.constant 0 : index
    %1 = vector.load %arg2[%c0_1, %c0_2] : memref<36x128xbf16, #tpu.memory_space<vmem>>, vector<36x128xbf16>
    %cst = arith.constant dense<0.000000e+00> : vector<256x128xf32>
    %2 = tpu.matmul %0, %1, %cst {dimension_numbers = #tpu.dot_dimension_numbers<[1], [0], [0], [1], [0, 0, 1, 1], [], []>} : vector<256x36xbf16>, vector<36x128xbf16>, vector<256x128xf32> -> vector<256x128xf32>
    %c0_3 = arith.constant 0 : index
    %c0_4 = arith.constant 0 : index
    %3 = vector.load %arg3[%c0_3, %c0_4] : memref<1x128xf32, #tpu.memory_space<vmem>>, vector<1x128xf32>
    %4 = vector.broadcast %3 : vector<1x128xf32> to vector<256x128xf32>
    %5 = arith.addf %2, %4 : vector<256x128xf32>
    %cst_5 = arith.constant 0.000000e+00 : f32
    %6 = vector.broadcast %cst_5 : f32 to vector<256x128xf32>
    %7 = arith.cmpf ogt, %5, %6 : vector<256x128xf32>
    %cst_6 = arith.constant 2.000000e-01 : f32
    %8 = vector.broadcast %cst_6 : f32 to vector<256x128xf32>
    %9 = arith.mulf %8, %5 : vector<256x128xf32>
    %10 = arith.select %7, %5, %9 : vector<256x128xi1>, vector<256x128xf32>
    %11 = arith.truncf %10 : vector<256x128xf32> to vector<256x128xbf16>
    %c0_7 = arith.constant 0 : index
    %c0_8 = arith.constant 0 : index
    %12 = vector.load %arg4[%c0_7, %c0_8] : memref<256x128xbf16, #tpu.memory_space<vmem>>, vector<256x128xbf16>
    tpu.vector_store %arg4[%c0_7, %c0_8], %11 {strides = array<i32>} : memref<256x128xbf16, #tpu.memory_space<vmem>>, vector<256x128xbf16>,
    return
  }
  func.func @transform_0(%arg0: i32) -> (i32, i32) {
    %c0_i32 = arith.constant 0 : i32
    %c0_i32_0 = arith.constant 0 : i32
    return %arg0, %c0_i32 : i32, i32
  }
  func.func @transform_1(%arg0: i32) -> (i32, i32) {
    %c0_i32 = arith.constant 0 : i32
    %c0_i32_0 = arith.constant 0 : i32
    %c0_i32_1 = arith.constant 0 : i32
    return %c0_i32, %c0_i32_0 : i32, i32
  }
  func.func @transform_2(%arg0: i32) -> (i32, i32) {
    %c0_i32 = arith.constant 0 : i32
    %c0_i32_0 = arith.constant 0 : i32
    %c0_i32_1 = arith.constant 0 : i32
    return %c0_i32, %c0_i32_0 : i32, i32
  }
  func.func @transform_3(%arg0: i32) -> (i32, i32) {
    %c0_i32 = arith.constant 0 : i32
    %c0_i32_0 = arith.constant 0 : i32
    return %arg0, %c0_i32 : i32, i32
  }
}

module attributes {stable_mosaic.version = 11 : i64} {
  func.func @conv_mm_add_kernel(%arg0: i32, %arg1: memref<128x72xbf16, #tpu.memory_space<vmem>>, %arg2: memref<72x128xbf16, #tpu.memory_space<vmem>>, %arg3: memref<1x128xf32, #tpu.memory_space<vmem>>, %arg4: memref<128x128xf32, #tpu.memory_space<vmem>>, %arg5: memref<128x128xf32, #tpu.memory_space<vmem>>) attributes {dimension_semantics = [#tpu.dimension_semantics<parallel>], iteration_bounds = array<i64: 1>, scalar_prefetch = 0 : i64, scratch_operands = 0 : i64, tpu.core_type = #tpu.core_type<tc>, window_params = [{transform_indices = @transform_0, window_bounds = array<i64: 128, 72>}, {pipeline_mode = #tpu.pipeline_mode<synchronous>, transform_indices = @transform_1, window_bounds = array<i64: 72, 128>}, {pipeline_mode = #tpu.pipeline_mode<synchronous>, transform_indices = @transform_2, window_bounds = array<i64: 1, 128>}, {transform_indices = @transform_3, window_bounds = array<i64: 128, 128>}, {transform_indices = @transform_4, window_bounds = array<i64: 128, 128>}]} {
    %c0 = arith.constant 0 : index
    %c0_0 = arith.constant 0 : index
    %0 = vector.load %arg1[%c0, %c0_0] : memref<128x72xbf16, #tpu.memory_space<vmem>>, vector<128x72xbf16>
    %c0_1 = arith.constant 0 : index
    %c0_2 = arith.constant 0 : index
    %1 = vector.load %arg2[%c0_1, %c0_2] : memref<72x128xbf16, #tpu.memory_space<vmem>>, vector<72x128xbf16>
    %cst = arith.constant dense<0.000000e+00> : vector<128x128xf32>
    %2 = tpu.matmul %0, %1, %cst {dimension_numbers = #tpu.dot_dimension_numbers<[1], [0], [0], [1], [0, 0, 1, 1], [], []>} : vector<128x72xbf16>, vector<72x128xbf16>, vector<128x128xf32> -> vector<128x128xf32>
    %c0_3 = arith.constant 0 : index
    %c0_4 = arith.constant 0 : index
    %3 = vector.load %arg3[%c0_3, %c0_4] : memref<1x128xf32, #tpu.memory_space<vmem>>, vector<1x128xf32>
    %4 = vector.broadcast %3 : vector<1x128xf32> to vector<128x128xf32>
    %5 = arith.addf %2, %4 : vector<128x128xf32>
    %cst_5 = arith.constant 0.000000e+00 : f32
    %6 = vector.broadcast %cst_5 : f32 to vector<128x128xf32>
    %7 = arith.cmpf ogt, %5, %6 : vector<128x128xf32>
    %cst_6 = arith.constant 2.000000e-01 : f32
    %8 = vector.broadcast %cst_6 : f32 to vector<128x128xf32>
    %9 = arith.mulf %8, %5 : vector<128x128xf32>
    %10 = arith.select %7, %5, %9 : vector<128x128xi1>, vector<128x128xf32>
    %c0_7 = arith.constant 0 : index
    %c0_8 = arith.constant 0 : index
    %11 = vector.load %arg4[%c0_7, %c0_8] : memref<128x128xf32, #tpu.memory_space<vmem>>, vector<128x128xf32>
    %12 = arith.addf %10, %11 : vector<128x128xf32>
    %c0_9 = arith.constant 0 : index
    %c0_10 = arith.constant 0 : index
    %13 = vector.load %arg5[%c0_9, %c0_10] : memref<128x128xf32, #tpu.memory_space<vmem>>, vector<128x128xf32>
    tpu.vector_store %arg5[%c0_9, %c0_10], %12 {strides = array<i32>} : memref<128x128xf32, #tpu.memory_space<vmem>>, vector<128x128xf32>,
    return
  }
  func.func @transform_0(%arg0: i32) -> (i32, i32) {
    %c0_i32 = arith.constant 0 : i32
    %c0_i32_0 = arith.constant 0 : i32
    return %arg0, %c0_i32 : i32, i32
  }
  func.func @transform_1(%arg0: i32) -> (i32, i32) {
    %c0_i32 = arith.constant 0 : i32
    %c0_i32_0 = arith.constant 0 : i32
    %c0_i32_1 = arith.constant 0 : i32
    return %c0_i32, %c0_i32_0 : i32, i32
  }
  func.func @transform_2(%arg0: i32) -> (i32, i32) {
    %c0_i32 = arith.constant 0 : i32
    %c0_i32_0 = arith.constant 0 : i32
    %c0_i32_1 = arith.constant 0 : i32
    return %c0_i32, %c0_i32_0 : i32, i32
  }
  func.func @transform_3(%arg0: i32) -> (i32, i32) {
    %c0_i32 = arith.constant 0 : i32
    %c0_i32_0 = arith.constant 0 : i32
    return %arg0, %c0_i32 : i32, i32
  }
  func.func @transform_4(%arg0: i32) -> (i32, i32) {
    %c0_i32 = arith.constant 0 : i32
    %c0_i32_0 = arith.constant 0 : i32
    return %arg0, %c0_i32 : i32, i32
  }
}

</mosaic_0001>

<llo_original>
// kernel: block_d_forward.3
$region0: #{block_d_forward.3}
  #allocation0 [shape = 'u32[]', space=smem, size = 0x4, offset = 0x4, fixed_abs, tag = 'smem constant byte address 0x4 - core index']
  #allocation1 [shape = 'u32[144,128]{1,0:T(1,128)}', space=vmem, size = 0x12000, scoped, tag = 'internal scratch']
  %s0 = inlined_call_operand.vmem [shape: bf16[128,36], index: 0, kind: input, shape index: {}]
  %s1 = inlined_call_operand.vmem [shape: bf16[36,128], index: 1, kind: input, shape index: {}]
  %s2 = inlined_call_operand.vmem [shape: f32[1,128], index: 2, kind: input, shape index: {}]
  %s3 = inlined_call_operand.vmem [shape: f32[128,128], index: 3, kind: output, shape index: {}]
  %s4 = sld [smem:[#allocation0]]
  $region22: #{block_d_forward.3} parent=0
    _
  %s6 = ssub.s32 1, %s4
  %s7 = scalar_select 0, %s6, %s4
  // Predicated region
  $region2: #{block_d_forward.3} parent=0 // pred_check
    _
  $region3: #{block_d_forward.3} parent=0 // pred_check_branch
    %9 = sbr.rel (0) target = $region5
  $region4: #{block_d_forward.3} parent=0 // pred_region
    _
  $region5: #{block_d_forward.3} parent=0 // pred_fallthru
    _
  // Predicated region
  $region6: #{block_d_forward.3} parent=0 // pred_check
    _
  $region7: #{block_d_forward.3} parent=0 // pred_check_branch
    %11 = sbr.rel (0) target = $region9
  $region8: #{block_d_forward.3} parent=0 // pred_region
    _
  $region9: #{block_d_forward.3} parent=0 // pred_fallthru
    _
  // Predicated region
  $region10: #{block_d_forward.3} parent=0 // pred_check
    _
  $region11: #{block_d_forward.3} parent=0 // pred_check_branch
    %13 = sbr.rel (0) target = $region13
  $region12: #{block_d_forward.3} parent=0 // pred_region
    _
  $region13: #{block_d_forward.3} parent=0 // pred_fallthru
    _
  %v15 = vld [vmem:[%s0] sm:$0xf]
  %v16 = vld [vmem:[%s0 + $0x4] sm:$0xf]
  %v17 = vld [vmem:[%s0 + $0x8] sm:$0xf]
  %v18 = vld [vmem:[%s0 + $0xc] sm:$0xf]
  %v19 = vld [vmem:[%s0 + $0x10] sm:$0xf]
  %v20 = vld [vmem:[%s0 + $0x14] sm:$0xf]
  %v21 = vld [vmem:[%s0 + $0x18] sm:$0xf]
  %v22 = vld [vmem:[%s0 + $0x1c] sm:$0xf]
  %v23 = vld [vmem:[%s0 + $0x20] sm:$0xf]
  %v24 = vld [vmem:[%s0 + $0x24] sm:$0xf]
  %v25 = vld [vmem:[%s0 + $0x28] sm:$0xf]
  %v26 = vld [vmem:[%s0 + $0x2c] sm:$0xf]
  %v27 = vld [vmem:[%s0 + $0x30] sm:$0xf]
  %v28 = vld [vmem:[%s0 + $0x34] sm:$0xf]
  %v29 = vld [vmem:[%s0 + $0x38] sm:$0xf]
  %v30 = vld [vmem:[%s0 + $0x3c] sm:$0xf]
  %v31 = vld [vmem:[%s1] sm:$0xf]
  %v32 = vld [vmem:[%s1 + $0x4] sm:$0xf]
  %v33 = vld [vmem:[%s1 + $0x8] sm:$0xf]
  %v34 = vld [vmem:[%s1 + $0xc] sm:$0xf]
  %v35 = vld [vmem:[%s1 + $0x10] sm:$0x3]
  %v36 = vld [vmem:[%s2] sm:$0x1]
  %v38 = vlaneseq
  %v39 = vshrl.u32 %v38, 7
  %v40 = vsub.s32 0, %v39
  %v41 = vrot.slane %v36, %v40
  %v59 = vunpack.c.l.b16 %v15
  %v60 = vunpack.c.l.b16 %v16
  %v61 = vunpack.c.l.b16 %v17
  %v62 = vunpack.c.l.b16 %v18
  %v63 = vunpack.c.l.b16 %v19
  %v64 = vunpack.c.l.b16 %v20
  %v65 = vunpack.c.l.b16 %v21
  %v66 = vunpack.c.l.b16 %v22
  %v67 = vunpack.c.l.b16 %v23
  %v68 = vunpack.c.l.b16 %v24
  %v69 = vunpack.c.l.b16 %v25
  %v70 = vunpack.c.l.b16 %v26
  %v71 = vunpack.c.l.b16 %v27
  %v72 = vunpack.c.l.b16 %v28
  %v73 = vunpack.c.l.b16 %v29
  %v74 = vunpack.c.l.b16 %v30
  %v75 = vpack.c.b16 %v60, %v59
  %v76 = vpack.c.b16 %v62, %v61
  %v77 = vpack.c.b16 %v64, %v63
  %v78 = vpack.c.b16 %v66, %v65
  %v79 = vpack.c.b16 %v68, %v67
  %v80 = vpack.c.b16 %v70, %v69
  %v81 = vpack.c.b16 %v72, %v71
  %v82 = vpack.c.b16 %v74, %v73
  %v88 = vunpack.c.l.b16 %v31
  %v89 = vunpack.c.l.b16 %v32
  %v90 = vunpack.c.l.b16 %v33
  %v91 = vunpack.c.l.b16 %v34
  %v92 = vunpack.c.l.b16 %v35
  %v93 = vpack.c.b16 %v89, %v88
  %v94 = vpack.c.b16 %v91, %v90
  %v95 = vpack.c.b16 %v92, %v92
  %vm98 = vcmask 293888
  %v100 = vsel %vm98, %v75, 0
  %v103 = vsel %vm98, %v76, 0
  %v106 = vsel %vm98, %v77, 0
  %v109 = vsel %vm98, %v78, 0
  %v112 = vsel %vm98, %v79, 0
  %v115 = vsel %vm98, %v80, 0
  %v118 = vsel %vm98, %v81, 0
  %v121 = vsel %vm98, %v82, 0
  %vm123 = vcmask 1041408
  %v125 = vsel %vm123, %v95, 0
  %127 = vmatprep.subr.bf16.mxu0 0
  %128 = vmatpush1.bf16.msra.mxu0 %v93
  %129 = vmatprep.subr.bf16.mxu0 0
  %130 = vmatpush1.bf16.msra.mxu0 %v94
  %131 = vmatprep.subr.bf16.mxu0 0
  %132 = vmatpush1.bf16.msra.mxu0 %v125
  %133 = vmatprep.subr.bf16.mxu0 0
  %134 = vmatpush1.bf16.msra.mxu0 0
  %135 = vmatprep.subr.bf16.mxu0 0
  %136 = vmatpush1.bf16.msra.mxu0 0
  %137 = vmatprep.subr.bf16.mxu0 0
  %138 = vmatpush1.bf16.msra.mxu0 0
  %139 = vmatprep.subr.bf16.mxu0 0
  %140 = vmatpush1.bf16.msra.mxu0 0
  %141 = vmatprep.subr.bf16.mxu0 0
  %142 = vmatpush1.bf16.msra.mxu0 0
  %143 = vmatprep.subr.bf16.mxu0 0
  %144 = vmatpush1.bf16.msra.mxu0 0
  %145 = vmatprep.subr.bf16.mxu0 0
  %146 = vmatpush1.bf16.msra.mxu0 0
  %147 = vmatprep.subr.bf16.mxu0 0
  %148 = vmatpush1.bf16.msra.mxu0 0
  %149 = vmatprep.subr.bf16.mxu0 0
  %150 = vmatpush1.bf16.msra.mxu0 0
  %151 = vmatprep.subr.bf16.mxu0 0
  %152 = vmatpush1.bf16.msra.mxu0 0
  %153 = vmatprep.subr.bf16.mxu0 0
  %154 = vmatpush1.bf16.msra.mxu0 0
  %155 = vmatprep.subr.bf16.mxu0 0
  %156 = vmatpush1.bf16.msra.mxu0 0
  %157 = vmatprep.subr.bf16.mxu0 0
  %158 = vmatpush1.bf16.msra.mxu0 0
  %159 = vmatprep.mubr.bf16.mxu0 0
  %160 = vmatmul.mubr.bf16.gmra.mrb[0].mxu0 %v100
  %v161 = vpop.f32.mrb[0].mxu0
  %v162 = vadd.f32 %v41, %v161
  %v163 = vpop.f32.mrb[0].mxu0
  %v164 = vpop.f32.mrb[0].mxu0
  %v165 = vadd.f32 %v41, %v164
  %v166 = vpop.f32.mrb[0].mxu0
  %167 = vmatprep.mubr.bf16.mxu0 0
  %168 = vmatmul.mubr.bf16.gmra.mrb[0].mxu0 %v103
  %v169 = vpop.f32.mrb[0].mxu0
  %v170 = vadd.f32 %v41, %v169
  %v171 = vpop.f32.mrb[0].mxu0
  %v172 = vpop.f32.mrb[0].mxu0
  %v173 = vadd.f32 %v41, %v172
  %v174 = vpop.f32.mrb[0].mxu0
  %175 = vmatprep.mubr.bf16.mxu0 0
  %176 = vmatmul.mubr.bf16.gmra.mrb[0].mxu0 %v106
  %v177 = vpop.f32.mrb[0].mxu0
  %v178 = vadd.f32 %v41, %v177
  %v179 = vpop.f32.mrb[0].mxu0
  %v180 = vpop.f32.mrb[0].mxu0
  %v181 = vadd.f32 %v41, %v180
  %v182 = vpop.f32.mrb[0].mxu0
  %183 = vmatprep.mubr.bf16.mxu0 0
  %184 = vmatmul.mubr.bf16.gmra.mrb[0].mxu0 %v109
  %v185 = vpop.f32.mrb[0].mxu0
  %v186 = vadd.f32 %v41, %v185
  %v187 = vpop.f32.mrb[0].mxu0
  %v188 = vpop.f32.mrb[0].mxu0
  %v189 = vadd.f32 %v41, %v188
  %v190 = vpop.f32.mrb[0].mxu0
  %191 = vmatprep.mubr.bf16.mxu0 0
  %192 = vmatmul.mubr.bf16.gmra.mrb[0].mxu0 %v112
  %v193 = vpop.f32.mrb[0].mxu0
  %v194 = vadd.f32 %v41, %v193
  %v195 = vpop.f32.mrb[0].mxu0
  %v196 = vpop.f32.mrb[0].mxu0
  %v197 = vadd.f32 %v41, %v196
  %v198 = vpop.f32.mrb[0].mxu0
  %199 = vmatprep.mubr.bf16.mxu0 0
  %200 = vmatmul.mubr.bf16.gmra.mrb[0].mxu0 %v115
  %v201 = vpop.f32.mrb[0].mxu0
  %v202 = vadd.f32 %v41, %v201
  %v203 = vpop.f32.mrb[0].mxu0
  %v204 = vpop.f32.mrb[0].mxu0
  %v205 = vadd.f32 %v41, %v204
  %v206 = vpop.f32.mrb[0].mxu0
  %207 = vmatprep.mubr.bf16.mxu0 0
  %208 = vmatmul.mubr.bf16.gmra.mrb[0].mxu0 %v118
  %v209 = vpop.f32.mrb[0].mxu0
  %v210 = vadd.f32 %v41, %v209
  %v211 = vpop.f32.mrb[0].mxu0
  %v212 = vpop.f32.mrb[0].mxu0
  %v213 = vadd.f32 %v41, %v212
  %v214 = vpop.f32.mrb[0].mxu0
  %215 = vmatprep.mubr.bf16.mxu0 0
  %216 = vmatmul.mubr.bf16.gmra.mrb[0].mxu0 %v121
  %v217 = vpop.f32.mrb[0].mxu0
  %v218 = vadd.f32 %v41, %v217
  %v219 = vpop.f32.mrb[0].mxu0
  %v220 = vpop.f32.mrb[0].mxu0
  %v221 = vadd.f32 %v41, %v220
  %v222 = vpop.f32.mrb[0].mxu0
  %223 = vdwg.mxu0
  %vm224 = vcmp.gt.f32.partialorder %v162, 0.0
  %vm225 = vcmp.gt.f32.partialorder %v165, 0.0
  %vm226 = vcmp.gt.f32.partialorder %v170, 0.0
  %vm227 = vcmp.gt.f32.partialorder %v173, 0.0
  %vm228 = vcmp.gt.f32.partialorder %v178, 0.0
  %vm229 = vcmp.gt.f32.partialorder %v181, 0.0
  %vm230 = vcmp.gt.f32.partialorder %v186, 0.0
  %vm231 = vcmp.gt.f32.partialorder %v189, 0.0
  %vm232 = vcmp.gt.f32.partialorder %v194, 0.0
  %vm233 = vcmp.gt.f32.partialorder %v197, 0.0
  %vm234 = vcmp.gt.f32.partialorder %v202, 0.0
  %vm235 = vcmp.gt.f32.partialorder %v205, 0.0
  %vm236 = vcmp.gt.f32.partialorder %v210, 0.0
  %vm237 = vcmp.gt.f32.partialorder %v213, 0.0
  %vm238 = vcmp.gt.f32.partialorder %v218, 0.0
  %vm239 = vcmp.gt.f32.partialorder %v221, 0.0
  %v240 = vmul.f32 %v162, 0.2
  %v241 = vmul.f32 %v165, 0.2
  %v242 = vmul.f32 %v170, 0.2
  %v243 = vmul.f32 %v173, 0.2
  %v244 = vmul.f32 %v178, 0.2
  %v245 = vmul.f32 %v181, 0.2
  %v246 = vmul.f32 %v186, 0.2
  %v247 = vmul.f32 %v189, 0.2
  %v248 = vmul.f32 %v194, 0.2
  %v249 = vmul.f32 %v197, 0.2
  %v250 = vmul.f32 %v202, 0.2
  %v251 = vmul.f32 %v205, 0.2
  %v252 = vmul.f32 %v210, 0.2
  %v253 = vmul.f32 %v213, 0.2
  %v254 = vmul.f32 %v218, 0.2
  %v255 = vmul.f32 %v221, 0.2
  %v256 = vsel %vm224, %v162, %v240
  %v257 = vsel %vm225, %v165, %v241
  %v258 = vsel %vm226, %v170, %v242
  %v259 = vsel %vm227, %v173, %v243
  %v260 = vsel %vm228, %v178, %v244
  %v261 = vsel %vm229, %v181, %v245
  %v262 = vsel %vm230, %v186, %v246
  %v263 = vsel %vm231, %v189, %v247
  %v264 = vsel %vm232, %v194, %v248
  %v265 = vsel %vm233, %v197, %v249
  %v266 = vsel %vm234, %v202, %v250
  %v267 = vsel %vm235, %v205, %v251
  %v268 = vsel %vm236, %v210, %v252
  %v269 = vsel %vm237, %v213, %v253
  %v270 = vsel %vm238, %v218, %v254
  %v271 = vsel %vm239, %v221, %v255
  %272 = vst [vmem:[%s3] sm:$0xff] %v256
  %273 = vst [vmem:[%s3 + $0x8] sm:$0xff] %v257
  %274 = vst [vmem:[%s3 + $0x10] sm:$0xff] %v258
  %275 = vst [vmem:[%s3 + $0x18] sm:$0xff] %v259
  %276 = vst [vmem:[%s3 + $0x20] sm:$0xff] %v260
  %277 = vst [vmem:[%s3 + $0x28] sm:$0xff] %v261
  %278 = vst [vmem:[%s3 + $0x30] sm:$0xff] %v262
  %279 = vst [vmem:[%s3 + $0x38] sm:$0xff] %v263
  %280 = vst [vmem:[%s3 + $0x40] sm:$0xff] %v264
  %281 = vst [vmem:[%s3 + $0x48] sm:$0xff] %v265
  %282 = vst [vmem:[%s3 + $0x50] sm:$0xff] %v266
  %283 = vst [vmem:[%s3 + $0x58] sm:$0xff] %v267
  %284 = vst [vmem:[%s3 + $0x60] sm:$0xff] %v268
  %285 = vst [vmem:[%s3 + $0x68] sm:$0xff] %v269
  %286 = vst [vmem:[%s3 + $0x70] sm:$0xff] %v270
  %287 = vst [vmem:[%s3 + $0x78] sm:$0xff] %v271
  // Predicated region
  $region14: #{block_d_forward.3} parent=0 // pred_check
    _
  $region15: #{block_d_forward.3} parent=0 // pred_check_branch
    %289 = sbr.rel (0) target = $region17
  $region16: #{block_d_forward.3} parent=0 // pred_region
    _
  $region17: #{block_d_forward.3} parent=0 // pred_fallthru
    _
  // Predicated region
  $region18: #{block_d_forward.3} parent=0 // pred_check
    _
  $region19: #{block_d_forward.3} parent=0 // pred_check_branch
    %291 = sbr.rel (0) target = $region21
  $region20: #{block_d_forward.3} parent=0 // pred_region
    _
  $region21: #{block_d_forward.3} parent=0 // pred_fallthru
    _

// kernel: block_d_forward.4
$region0: #{block_d_forward.4}
  #allocation0 [shape = 'u32[]', space=smem, size = 0x4, offset = 0x4, fixed_abs, tag = 'smem constant byte address 0x4 - core index']
  #allocation1 [shape = 'u32[144,128]{1,0:T(1,128)}', space=vmem, size = 0x12000, scoped, tag = 'internal scratch']
  %s0 = inlined_call_operand.vmem [shape: bf16[512,36], index: 0, kind: input, shape index: {}]
  %s1 = inlined_call_operand.vmem [shape: bf16[36,128], index: 1, kind: input, shape index: {}]
  %s2 = inlined_call_operand.vmem [shape: f32[1,128], index: 2, kind: input, shape index: {}]
  %s3 = inlined_call_operand.vmem [shape: bf16[512,128], index: 3, kind: output, shape index: {}]
  %s4 = sld [smem:[#allocation0]]
  $region45: #{block_d_forward.4} parent=0
    _
  %s6 = ssub.s32 1, %s4
  %s7 = scalar_select 0, %s6, %s4
  loop: start=0, step=1, limit=4
  $region2: #{block_d_forward.4} parent=0 // loop_pre_header
    _
  $region3: #{block_d_forward.4} parent=0 // loop_header
    %s9 = sphi 0, %s13
    %p10 = scmp.ge.s32.totalorder %s9, 4
    %s19 = sphi 0, %s21
    %s22 = sphi 0, %s19
    %s23 = sphi 0, %s22
    %s39 = sphi 0, %s23
    %s43 = sphi 0, %s43
    %s45 = sphi 0, %s43
    %s46 = sphi 0, %s45
    %s60 = sphi 0, %s46
    %s64 = sphi 0, %s64
    %s66 = sphi 0, %s64
    %s67 = sphi 0, %s66
    %s81 = sphi 0, %s67
    %s87 = sphi 0, %s89
    %s90 = sphi 0, %s87
    %s91 = sphi 0, %s90
    %s107 = sphi 0, %s91
  $region4: #{block_d_forward.4} parent=0 // loop_header_branch
    %12 = sbr.rel (%p10) target = $region8
  $region5: #{block_d_forward.4} parent=0 // loop_body
    %s14 = ssub.s32 %s9, 1
    %s15 = ssub.s32 %s9, 2
    %s16 = sadd.s32 %s9, 1
    %s17 = ssub.s32 %s9, %s16
    %p18 = scmp.eq.s32.totalorder %s17, 0
    %s20 = sadd.s32 %s19, 1
    %s21 = scalar_select %p18, %s19, %s20
    %p24 = pneg %p18
    %p25 = scmp.eq.s32.totalorder %s9, 1
    %p26 = por %p24, %p25
    %p27 = scmp.ne.s32.totalorder %s19, %s22
    %p28 = scmp.eq.s32.totalorder %s9, 0
    %p29 = por %p27, %p28
    %p30 = scmp.ne.s32.totalorder %s19, %s22
    %p31 = scmp.eq.s32.totalorder %s14, 1
    %p32 = por %p30, %p31
    %p33 = scmp.ne.s32.totalorder %s22, %s23
    %p34 = scmp.eq.s32.totalorder %s14, 0
    %p35 = por %p33, %p34
    %p36 = scmp.ne.s32.totalorder %s22, %s23
    %p37 = scmp.eq.s32.totalorder %s15, 1
    %p38 = por %p36, %p37
    %p40 = scmp.ne.s32.totalorder %s23, %s39
    %p41 = scmp.eq.s32.totalorder %s15, 0
    %p42 = por %p40, %p41
    %s44 = sadd.s32 %s43, 1
    %p47 = scmp.eq.s32.totalorder %s9, 1
    %p48 = scmp.ne.s32.totalorder %s43, %s45
    %p49 = scmp.eq.s32.totalorder %s9, 0
    %p50 = por %p48, %p49
    %p51 = scmp.ne.s32.totalorder %s43, %s45
    %p52 = scmp.eq.s32.totalorder %s14, 1
    %p53 = por %p51, %p52
    %p54 = scmp.ne.s32.totalorder %s45, %s46
    %p55 = scmp.eq.s32.totalorder %s14, 0
    %p56 = por %p54, %p55
    %p57 = scmp.ne.s32.totalorder %s45, %s46
    %p58 = scmp.eq.s32.totalorder %s15, 1
    %p59 = por %p57, %p58
    %p61 = scmp.ne.s32.totalorder %s46, %s60
    %p62 = scmp.eq.s32.totalorder %s15, 0
    %p63 = por %p61, %p62
    %s65 = sadd.s32 %s64, 1
    %p68 = scmp.eq.s32.totalorder %s9, 1
    %p69 = scmp.ne.s32.totalorder %s64, %s66
    %p70 = scmp.eq.s32.totalorder %s9, 0
    %p71 = por %p69, %p70
    %p72 = scmp.ne.s32.totalorder %s64, %s66
    %p73 = scmp.eq.s32.totalorder %s14, 1
    %p74 = por %p72, %p73
    %p75 = scmp.ne.s32.totalorder %s66, %s67
    %p76 = scmp.eq.s32.totalorder %s14, 0
    %p77 = por %p75, %p76
    %p78 = scmp.ne.s32.totalorder %s66, %s67
    %p79 = scmp.eq.s32.totalorder %s15, 1
    %p80 = por %p78, %p79
    %p82 = scmp.ne.s32.totalorder %s67, %s81
    %p83 = scmp.eq.s32.totalorder %s15, 0
    %p84 = por %p82, %p83
    %s85 = ssub.s32 %s9, %s16
    %p86 = scmp.eq.s32.totalorder %s85, 0
    %s88 = sadd.s32 %s87, 1
    %s89 = scalar_select %p86, %s87, %s88
    %p92 = pneg %p86
    %p93 = scmp.eq.s32.totalorder %s9, 1
    %p94 = por %p92, %p93
    %p95 = scmp.ne.s32.totalorder %s87, %s90
    %p96 = scmp.eq.s32.totalorder %s9, 0
    %p97 = por %p95, %p96
    %p98 = scmp.ne.s32.totalorder %s87, %s90
    %p99 = scmp.eq.s32.totalorder %s14, 1
    %p100 = por %p98, %p99
    %p101 = scmp.ne.s32.totalorder %s90, %s91
    %p102 = scmp.eq.s32.totalorder %s14, 0
    %p103 = por %p101, %p102
    %p104 = scmp.ne.s32.totalorder %s90, %s91
    %p105 = scmp.eq.s32.totalorder %s15, 1
    %p106 = por %p104, %p105
    %p108 = scmp.ne.s32.totalorder %s91, %s107
    %p109 = scmp.eq.s32.totalorder %s15, 0
    %p110 = por %p108, %p109
    %p111 = scmp.le.s32.totalorder 1, %s9
    %p112 = scmp.lt.s32.totalorder %s9, 3
    %p113 = pnand %p111, %p112
    %p114 = pneg %p113
    // Predicated region
    $region9: #{block_d_forward.4} parent=5 // pred_check
      _
    $region10: #{block_d_forward.4} parent=5 // pred_check_branch
      %116 = sbr.rel (%p113) target = $region12
    $region11: #{block_d_forward.4} parent=5 // pred_region
      %s117 = ssub.s32 %s9, 1
      // Predicated region
      $region13: #{block_d_forward.4} parent=11 // pred_check
        %p118 = pneg %p56
      $region14: #{block_d_forward.4} parent=11 // pred_check_branch
        %120 = sbr.rel (%p118) target = $region16
      $region15: #{block_d_forward.4} parent=11 // pred_region
        _
      $region16: #{block_d_forward.4} parent=11 // pred_fallthru
        _
      // Predicated region
      $region17: #{block_d_forward.4} parent=11 // pred_check
        %p121 = pneg %p77
      $region18: #{block_d_forward.4} parent=11 // pred_check_branch
        %123 = sbr.rel (%p121) target = $region20
      $region19: #{block_d_forward.4} parent=11 // pred_region
        _
      $region20: #{block_d_forward.4} parent=11 // pred_fallthru
        _
    $region12: #{block_d_forward.4} parent=5 // pred_fallthru
      _
    %p124 = scmp.lt.s32.totalorder %s9, 2
    // Predicated region
    $region21: #{block_d_forward.4} parent=5 // pred_check
      %p125 = pneg %p124
    $region22: #{block_d_forward.4} parent=5 // pred_check_branch
      %127 = sbr.rel (%p125) target = $region24
    $region23: #{block_d_forward.4} parent=5 // pred_region
      // Predicated region
      $region25: #{block_d_forward.4} parent=23 // pred_check
        %p128 = pneg %p29
      $region26: #{block_d_forward.4} parent=23 // pred_check_branch
        %130 = sbr.rel (%p128) target = $region28
      $region27: #{block_d_forward.4} parent=23 // pred_region
        %s131 = smul.u32 32, %s9
        %p132 = scmp.lt.s32.totalorder %s131, 63
        %s133 = scalar_select %p132, %s131, 63
        %s134 = smul.addr %s133, 4
        %s135 = scalar_lea.vmem %s0, %s134
        %s136 = smul.u32 32, %s9
      $region28: #{block_d_forward.4} parent=23 // pred_fallthru
        _
    $region24: #{block_d_forward.4} parent=5 // pred_fallthru
      _
    %p137 = scmp.le.s32.totalorder 1, %s9
    %p138 = scmp.lt.s32.totalorder %s9, 3
    %p139 = pnand %p137, %p138
    %p140 = pneg %p139
    // Predicated region
    $region29: #{block_d_forward.4} parent=5 // pred_check
      _
    $region30: #{block_d_forward.4} parent=5 // pred_check_branch
      %142 = sbr.rel (%p139) target = $region32
    $region31: #{block_d_forward.4} parent=5 // pred_region
      %s143 = ssub.s32 %s9, 1
      %s144 = smul.u32 32, %s14
      %p145 = scmp.lt.s32.totalorder %s144, 63
      %s146 = scalar_select %p145, %s144, 63
      %s147 = smul.addr %s146, 4
      %s148 = scalar_lea.vmem %s0, %s147
      %p149 = pneg %p35
      %p150 = pneg %p32
      %p151 = pneg %p56
      %p152 = pneg %p53
      %p153 = pneg %p77
      %p154 = pneg %p74
      %p155 = pneg %p103
      %p156 = pneg %p100
      %s157 = smul.u32 32, %s14
      %p158 = scmp.lt.s32.totalorder %s157, 63
      %s159 = scalar_select %p158, %s157, 63
      %s160 = smul.addr %s159, 4
      %s161 = scalar_lea.vmem %s3, %s160
      %s162 = smul.u32 32, %s14
      %p163 = scmp.lt.s32.totalorder %s162, 63
      %s164 = scalar_select %p163, %s162, 63
      %s165 = smul.addr %s164, 4
      %s166 = scalar_lea.vmem %s0, %s165
      %s167 = smul.u32 32, %s14
      %s168 = smul.u32 32, %s14
      %p169 = scmp.lt.s32.totalorder %s168, 63
      %s170 = scalar_select %p169, %s168, 63
      %s171 = smul.addr %s170, 4
      %s172 = scalar_lea.vmem %s3, %s171
      %s173 = smul.u32 32, %s14
      %v175 = vld [vmem:[%s166] sm:$0xf]
      %v176 = vld [vmem:[%s166 + $0x4] sm:$0xf]
      %v177 = vld [vmem:[%s166 + $0x8] sm:$0xf]
      %v178 = vld [vmem:[%s166 + $0xc] sm:$0xf]
      %v179 = vld [vmem:[%s166 + $0x10] sm:$0xf]
      %v180 = vld [vmem:[%s166 + $0x14] sm:$0xf]
      %v181 = vld [vmem:[%s166 + $0x18] sm:$0xf]
      %v182 = vld [vmem:[%s166 + $0x1c] sm:$0xf]
      %v183 = vld [vmem:[%s166 + $0x20] sm:$0xf]
      %v184 = vld [vmem:[%s166 + $0x24] sm:$0xf]
      %v185 = vld [vmem:[%s166 + $0x28] sm:$0xf]
      %v186 = vld [vmem:[%s166 + $0x2c] sm:$0xf]
      %v187 = vld [vmem:[%s166 + $0x30] sm:$0xf]
      %v188 = vld [vmem:[%s166 + $0x34] sm:$0xf]
      %v189 = vld [vmem:[%s166 + $0x38] sm:$0xf]
      %v190 = vld [vmem:[%s166 + $0x3c] sm:$0xf]
      %v191 = vld [vmem:[%s166 + $0x40] sm:$0xf]
      %v192 = vld [vmem:[%s166 + $0x44] sm:$0xf]
      %v193 = vld [vmem:[%s166 + $0x48] sm:$0xf]
      %v194 = vld [vmem:[%s166 + $0x4c] sm:$0xf]
      %v195 = vld [vmem:[%s166 + $0x50] sm:$0xf]
      %v196 = vld [vmem:[%s166 + $0x54] sm:$0xf]
      %v197 = vld [vmem:[%s166 + $0x58] sm:$0xf]
      %v198 = vld [vmem:[%s166 + $0x5c] sm:$0xf]
      %v199 = vld [vmem:[%s166 + $0x60] sm:$0xf]
      %v200 = vld [vmem:[%s166 + $0x64] sm:$0xf]
      %v201 = vld [vmem:[%s166 + $0x68] sm:$0xf]
      %v202 = vld [vmem:[%s166 + $0x6c] sm:$0xf]
      %v203 = vld [vmem:[%s166 + $0x70] sm:$0xf]
      %v204 = vld [vmem:[%s166 + $0x74] sm:$0xf]
      %v205 = vld [vmem:[%s166 + $0x78] sm:$0xf]
      %v206 = vld [vmem:[%s166 + $0x7c] sm:$0xf]
      %v207 = vld [vmem:[%s1] sm:$0xf]
      %v208 = vld [vmem:[%s1 + $0x4] sm:$0xf]
      %v209 = vld [vmem:[%s1 + $0x8] sm:$0xf]
      %v210 = vld [vmem:[%s1 + $0xc] sm:$0xf]
      %v211 = vld [vmem:[%s1 + $0x10] sm:$0x3]
      %v212 = vld [vmem:[%s2] sm:$0x1]
      %v214 = vlaneseq
      %v215 = vshrl.u32 %v214, 7
      %v216 = vsub.s32 0, %v215
      %v217 = vrot.slane %v212, %v216
      %v251 = vunpack.c.l.b16 %v175
      %v252 = vunpack.c.l.b16 %v176
      %v253 = vunpack.c.l.b16 %v177
      %v254 = vunpack.c.l.b16 %v178
      %v255 = vunpack.c.l.b16 %v179
      %v256 = vunpack.c.l.b16 %v180
      %v257 = vunpack.c.l.b16 %v181
      %v258 = vunpack.c.l.b16 %v182
      %v259 = vunpack.c.l.b16 %v183
      %v260 = vunpack.c.l.b16 %v184
      %v261 = vunpack.c.l.b16 %v185
      %v262 = vunpack.c.l.b16 %v186
      %v263 = vunpack.c.l.b16 %v187
      %v264 = vunpack.c.l.b16 %v188
      %v265 = vunpack.c.l.b16 %v189
      %v266 = vunpack.c.l.b16 %v190
      %v267 = vunpack.c.l.b16 %v191
      %v268 = vunpack.c.l.b16 %v192
      %v269 = vunpack.c.l.b16 %v193
      %v270 = vunpack.c.l.b16 %v194
      %v271 = vunpack.c.l.b16 %v195
      %v272 = vunpack.c.l.b16 %v196
      %v273 = vunpack.c.l.b16 %v197
      %v274 = vunpack.c.l.b16 %v198
      %v275 = vunpack.c.l.b16 %v199
      %v276 = vunpack.c.l.b16 %v200
      %v277 = vunpack.c.l.b16 %v201
      %v278 = vunpack.c.l.b16 %v202
      %v279 = vunpack.c.l.b16 %v203
      %v280 = vunpack.c.l.b16 %v204
      %v281 = vunpack.c.l.b16 %v205
      %v282 = vunpack.c.l.b16 %v206
      %v283 = vpack.c.b16 %v252, %v251
      %v284 = vpack.c.b16 %v254, %v253
      %v285 = vpack.c.b16 %v256, %v255
      %v286 = vpack.c.b16 %v258, %v257
      %v287 = vpack.c.b16 %v260, %v259
      %v288 = vpack.c.b16 %v262, %v261
      %v289 = vpack.c.b16 %v264, %v263
      %v290 = vpack.c.b16 %v266, %v265
      %v291 = vpack.c.b16 %v268, %v267
      %v292 = vpack.c.b16 %v270, %v269
      %v293 = vpack.c.b16 %v272, %v271
      %v294 = vpack.c.b16 %v274, %v273
      %v295 = vpack.c.b16 %v276, %v275
      %v296 = vpack.c.b16 %v278, %v277
      %v297 = vpack.c.b16 %v280, %v279
      %v298 = vpack.c.b16 %v282, %v281
      %v304 = vunpack.c.l.b16 %v207
      %v305 = vunpack.c.l.b16 %v208
      %v306 = vunpack.c.l.b16 %v209
      %v307 = vunpack.c.l.b16 %v210
      %v308 = vunpack.c.l.b16 %v211
      %v309 = vpack.c.b16 %v305, %v304
      %v310 = vpack.c.b16 %v307, %v306
      %v311 = vpack.c.b16 %v308, %v308
      %vm314 = vcmask 293888
      %v316 = vsel %vm314, %v283, 0
      %v319 = vsel %vm314, %v284, 0
      %v322 = vsel %vm314, %v285, 0
      %v325 = vsel %vm314, %v286, 0
      %v328 = vsel %vm314, %v287, 0
      %v331 = vsel %vm314, %v288, 0
      %v334 = vsel %vm314, %v289, 0
      %v337 = vsel %vm314, %v290, 0
      %v340 = vsel %vm314, %v291, 0
      %v343 = vsel %vm314, %v292, 0
      %v346 = vsel %vm314, %v293, 0
      %v349 = vsel %vm314, %v294, 0
      %v352 = vsel %vm314, %v295, 0
      %v355 = vsel %vm314, %v296, 0
      %v358 = vsel %vm314, %v297, 0
      %v361 = vsel %vm314, %v298, 0
      %vm363 = vcmask 1041408
      %v365 = vsel %vm363, %v311, 0
      %367 = vmatprep.subr.bf16.mxu0 0
      %368 = vmatpush1.bf16.msra.mxu0 %v309
      %369 = vmatprep.subr.bf16.mxu0 0
      %370 = vmatpush1.bf16.msra.mxu0 %v310
      %371 = vmatprep.subr.bf16.mxu0 0
      %372 = vmatpush1.bf16.msra.mxu0 %v365
      %373 = vmatprep.subr.bf16.mxu0 0
      %374 = vmatpush1.bf16.msra.mxu0 0
      %375 = vmatprep.subr.bf16.mxu0 0
      %376 = vmatpush1.bf16.msra.mxu0 0
      %377 = vmatprep.subr.bf16.mxu0 0
      %378 = vmatpush1.bf16.msra.mxu0 0
      %379 = vmatprep.subr.bf16.mxu0 0
      %380 = vmatpush1.bf16.msra.mxu0 0
      %381 = vmatprep.subr.bf16.mxu0 0
      %382 = vmatpush1.bf16.msra.mxu0 0
      %383 = vmatprep.subr.bf16.mxu0 0
      %384 = vmatpush1.bf16.msra.mxu0 0
      %385 = vmatprep.subr.bf16.mxu0 0
      %386 = vmatpush1.bf16.msra.mxu0 0
      %387 = vmatprep.subr.bf16.mxu0 0
      %388 = vmatpush1.bf16.msra.mxu0 0
      %389 = vmatprep.subr.bf16.mxu0 0
      %390 = vmatpush1.bf16.msra.mxu0 0
      %391 = vmatprep.subr.bf16.mxu0 0
      %392 = vmatpush1.bf16.msra.mxu0 0
      %393 = vmatprep.subr.bf16.mxu0 0
      %394 = vmatpush1.bf16.msra.mxu0 0
      %395 = vmatprep.subr.bf16.mxu0 0
      %396 = vmatpush1.bf16.msra.mxu0 0
      %397 = vmatprep.subr.bf16.mxu0 0
      %398 = vmatpush1.bf16.msra.mxu0 0
      %399 = vmatprep.mubr.bf16.mxu0 0
      %400 = vmatmul.mubr.bf16.gmra.mrb[0].mxu0 %v316
      %v401 = vpop.f32.mrb[0].mxu0
      %v402 = vadd.f32 %v217, %v401
      %v403 = vpop.f32.mrb[0].mxu0
      %v404 = vpop.f32.mrb[0].mxu0
      %v405 = vadd.f32 %v217, %v404
      %v406 = vpop.f32.mrb[0].mxu0
      %407 = vmatprep.mubr.bf16.mxu0 0
      %408 = vmatmul.mubr.bf16.gmra.mrb[0].mxu0 %v319
      %v409 = vpop.f32.mrb[0].mxu0
      %v410 = vadd.f32 %v217, %v409
      %v411 = vpop.f32.mrb[0].mxu0
      %v412 = vpop.f32.mrb[0].mxu0
      %v413 = vadd.f32 %v217, %v412
      %v414 = vpop.f32.mrb[0].mxu0
      %415 = vmatprep.mubr.bf16.mxu0 0
      %416 = vmatmul.mubr.bf16.gmra.mrb[0].mxu0 %v322
      %v417 = vpop.f32.mrb[0].mxu0
      %v418 = vadd.f32 %v217, %v417
      %v419 = vpop.f32.mrb[0].mxu0
      %v420 = vpop.f32.mrb[0].mxu0
      %v421 = vadd.f32 %v217, %v420
      %v422 = vpop.f32.mrb[0].mxu0
      %423 = vmatprep.mubr.bf16.mxu0 0
      %424 = vmatmul.mubr.bf16.gmra.mrb[0].mxu0 %v325
      %v425 = vpop.f32.mrb[0].mxu0
      %v426 = vadd.f32 %v217, %v425
      %v427 = vpop.f32.mrb[0].mxu0
      %v428 = vpop.f32.mrb[0].mxu0
      %v429 = vadd.f32 %v217, %v428
      %v430 = vpop.f32.mrb[0].mxu0
      %431 = vmatprep.mubr.bf16.mxu0 0
      %432 = vmatmul.mubr.bf16.gmra.mrb[0].mxu0 %v328
      %v433 = vpop.f32.mrb[0].mxu0
      %v434 = vadd.f32 %v217, %v433
      %v435 = vpop.f32.mrb[0].mxu0
      %v436 = vpop.f32.mrb[0].mxu0
      %v437 = vadd.f32 %v217, %v436
      %v438 = vpop.f32.mrb[0].mxu0
      %439 = vmatprep.mubr.bf16.mxu0 0
      %440 = vmatmul.mubr.bf16.gmra.mrb[0].mxu0 %v331
      %v441 = vpop.f32.mrb[0].mxu0
      %v442 = vadd.f32 %v217, %v441
      %v443 = vpop.f32.mrb[0].mxu0
      %v444 = vpop.f32.mrb[0].mxu0
      %v445 = vadd.f32 %v217, %v444
      %v446 = vpop.f32.mrb[0].mxu0
      %447 = vmatprep.mubr.bf16.mxu0 0
      %448 = vmatmul.mubr.bf16.gmra.mrb[0].mxu0 %v334
      %v449 = vpop.f32.mrb[0].mxu0
      %v450 = vadd.f32 %v217, %v449
      %v451 = vpop.f32.mrb[0].mxu0
      %v452 = vpop.f32.mrb[0].mxu0
      %v453 = vadd.f32 %v217, %v452
      %v454 = vpop.f32.mrb[0].mxu0
      %455 = vmatprep.mubr.bf16.mxu0 0
      %456 = vmatmul.mubr.bf16.gmra.mrb[0].mxu0 %v337
      %v457 = vpop.f32.mrb[0].mxu0
      %v458 = vadd.f32 %v217, %v457
      %v459 = vpop.f32.mrb[0].mxu0
      %v460 = vpop.f32.mrb[0].mxu0
      %v461 = vadd.f32 %v217, %v460
      %v462 = vpop.f32.mrb[0].mxu0
      %463 = vmatprep.mubr.bf16.mxu0 0
      %464 = vmatmul.mubr.bf16.gmra.mrb[0].mxu0 %v340
      %v465 = vpop.f32.mrb[0].mxu0
      %v466 = vadd.f32 %v217, %v465
      %v467 = vpop.f32.mrb[0].mxu0
      %v468 = vpop.f32.mrb[0].mxu0
      %v469 = vadd.f32 %v217, %v468
      %v470 = vpop.f32.mrb[0].mxu0
      %471 = vmatprep.mubr.bf16.mxu0 0
      %472 = vmatmul.mubr.bf16.gmra.mrb[0].mxu0 %v343
      %v473 = vpop.f32.mrb[0].mxu0
      %v474 = vadd.f32 %v217, %v473
      %v475 = vpop.f32.mrb[0].mxu0
      %v476 = vpop.f32.mrb[0].mxu0
      %v477 = vadd.f32 %v217, %v476
      %v478 = vpop.f32.mrb[0].mxu0
      %479 = vmatprep.mubr.bf16.mxu0 0
      %480 = vmatmul.mubr.bf16.gmra.mrb[0].mxu0 %v346
      %v481 = vpop.f32.mrb[0].mxu0
      %v482 = vadd.f32 %v217, %v481
      %v483 = vpop.f32.mrb[0].mxu0
      %v484 = vpop.f32.mrb[0].mxu0
      %v485 = vadd.f32 %v217, %v484
      %v486 = vpop.f32.mrb[0].mxu0
      %487 = vmatprep.mubr.bf16.mxu0 0
      %488 = vmatmul.mubr.bf16.gmra.mrb[0].mxu0 %v349
      %v489 = vpop.f32.mrb[0].mxu0
      %v490 = vadd.f32 %v217, %v489
      %v491 = vpop.f32.mrb[0].mxu0
      %v492 = vpop.f32.mrb[0].mxu0
      %v493 = vadd.f32 %v217, %v492
      %v494 = vpop.f32.mrb[0].mxu0
      %495 = vmatprep.mubr.bf16.mxu0 0
      %496 = vmatmul.mubr.bf16.gmra.mrb[0].mxu0 %v352
      %v497 = vpop.f32.mrb[0].mxu0
      %v498 = vadd.f32 %v217, %v497
      %v499 = vpop.f32.mrb[0].mxu0
      %v500 = vpop.f32.mrb[0].mxu0
      %v501 = vadd.f32 %v217, %v500
      %v502 = vpop.f32.mrb[0].mxu0
      %503 = vmatprep.mubr.bf16.mxu0 0
      %504 = vmatmul.mubr.bf16.gmra.mrb[0].mxu0 %v355
      %v505 = vpop.f32.mrb[0].mxu0
      %v506 = vadd.f32 %v217, %v505
      %v507 = vpop.f32.mrb[0].mxu0
      %v508 = vpop.f32.mrb[0].mxu0
      %v509 = vadd.f32 %v217, %v508
      %v510 = vpop.f32.mrb[0].mxu0
      %511 = vmatprep.mubr.bf16.mxu0 0
      %512 = vmatmul.mubr.bf16.gmra.mrb[0].mxu0 %v358
      %v513 = vpop.f32.mrb[0].mxu0
      %v514 = vadd.f32 %v217, %v513
      %v515 = vpop.f32.mrb[0].mxu0
      %v516 = vpop.f32.mrb[0].mxu0
      %v517 = vadd.f32 %v217, %v516
      %v518 = vpop.f32.mrb[0].mxu0
      %519 = vmatprep.mubr.bf16.mxu0 0
      %520 = vmatmul.mubr.bf16.gmra.mrb[0].mxu0 %v361
      %v521 = vpop.f32.mrb[0].mxu0
      %v522 = vadd.f32 %v217, %v521
      %v523 = vpop.f32.mrb[0].mxu0
      %v524 = vpop.f32.mrb[0].mxu0
      %v525 = vadd.f32 %v217, %v524
      %v526 = vpop.f32.mrb[0].mxu0
      %527 = vdwg.mxu0
      %vm528 = vcmp.gt.f32.partialorder %v402, 0.0
      %vm529 = vcmp.gt.f32.partialorder %v405, 0.0
      %vm530 = vcmp.gt.f32.partialorder %v410, 0.0
      %vm531 = vcmp.gt.f32.partialorder %v413, 0.0
      %vm532 = vcmp.gt.f32.partialorder %v418, 0.0
      %vm533 = vcmp.gt.f32.partialorder %v421, 0.0
      %vm534 = vcmp.gt.f32.partialorder %v426, 0.0
      %vm535 = vcmp.gt.f32.partialorder %v429, 0.0
      %vm536 = vcmp.gt.f32.partialorder %v434, 0.0
      %vm537 = vcmp.gt.f32.partialorder %v437, 0.0
      %vm538 = vcmp.gt.f32.partialorder %v442, 0.0
      %vm539 = vcmp.gt.f32.partialorder %v445, 0.0
      %vm540 = vcmp.gt.f32.partialorder %v450, 0.0
      %vm541 = vcmp.gt.f32.partialorder %v453, 0.0
      %vm542 = vcmp.gt.f32.partialorder %v458, 0.0
      %vm543 = vcmp.gt.f32.partialorder %v461, 0.0
      %vm544 = vcmp.gt.f32.partialorder %v466, 0.0
      %vm545 = vcmp.gt.f32.partialorder %v469, 0.0
      %vm546 = vcmp.gt.f32.partialorder %v474, 0.0
      %vm547 = vcmp.gt.f32.partialorder %v477, 0.0
      %vm548 = vcmp.gt.f32.partialorder %v482, 0.0
      %vm549 = vcmp.gt.f32.partialorder %v485, 0.0
      %vm550 = vcmp.gt.f32.partialorder %v490, 0.0
      %vm551 = vcmp.gt.f32.partialorder %v493, 0.0
      %vm552 = vcmp.gt.f32.partialorder %v498, 0.0
      %vm553 = vcmp.gt.f32.partialorder %v501, 0.0
      %vm554 = vcmp.gt.f32.partialorder %v506, 0.0
      %vm555 = vcmp.gt.f32.partialorder %v509, 0.0
      %vm556 = vcmp.gt.f32.partialorder %v514, 0.0
      %vm557 = vcmp.gt.f32.partialorder %v517, 0.0
      %vm558 = vcmp.gt.f32.partialorder %v522, 0.0
      %vm559 = vcmp.gt.f32.partialorder %v525, 0.0
      %v560 = vmul.f32 %v402, 0.2
      %v561 = vmul.f32 %v405, 0.2
      %v562 = vmul.f32 %v410, 0.2
      %v563 = vmul.f32 %v413, 0.2
      %v564 = vmul.f32 %v418, 0.2
      %v565 = vmul.f32 %v421, 0.2
      %v566 = vmul.f32 %v426, 0.2
      %v567 = vmul.f32 %v429, 0.2
      %v568 = vmul.f32 %v434, 0.2
      %v569 = vmul.f32 %v437, 0.2
      %v570 = vmul.f32 %v442, 0.2
      %v571 = vmul.f32 %v445, 0.2
      %v572 = vmul.f32 %v450, 0.2
      %v573 = vmul.f32 %v453, 0.2
      %v574 = vmul.f32 %v458, 0.2
      %v575 = vmul.f32 %v461, 0.2
      %v576 = vmul.f32 %v466, 0.2
      %v577 = vmul.f32 %v469, 0.2
      %v578 = vmul.f32 %v474, 0.2
      %v579 = vmul.f32 %v477, 0.2
      %v580 = vmul.f32 %v482, 0.2
      %v581 = vmul.f32 %v485, 0.2
      %v582 = vmul.f32 %v490, 0.2
      %v583 = vmul.f32 %v493, 0.2
      %v584 = vmul.f32 %v498, 0.2
      %v585 = vmul.f32 %v501, 0.2
      %v586 = vmul.f32 %v506, 0.2
      %v587 = vmul.f32 %v509, 0.2
      %v588 = vmul.f32 %v514, 0.2
      %v589 = vmul.f32 %v517, 0.2
      %v590 = vmul.f32 %v522, 0.2
      %v591 = vmul.f32 %v525, 0.2
      %v592 = vsel %vm528, %v402, %v560
      %v593 = vsel %vm529, %v405, %v561
      %v594 = vsel %vm530, %v410, %v562
      %v595 = vsel %vm531, %v413, %v563
      %v596 = vsel %vm532, %v418, %v564
      %v597 = vsel %vm533, %v421, %v565
      %v598 = vsel %vm534, %v426, %v566
      %v599 = vsel %vm535, %v429, %v567
      %v600 = vsel %vm536, %v434, %v568
      %v601 = vsel %vm537, %v437, %v569
      %v602 = vsel %vm538, %v442, %v570
      %v603 = vsel %vm539, %v445, %v571
      %v604 = vsel %vm540, %v450, %v572
      %v605 = vsel %vm541, %v453, %v573
      %v606 = vsel %vm542, %v458, %v574
      %v607 = vsel %vm543, %v461, %v575
      %v608 = vsel %vm544, %v466, %v576
      %v609 = vsel %vm545, %v469, %v577
      %v610 = vsel %vm546, %v474, %v578
      %v611 = vsel %vm547, %v477, %v579
      %v612 = vsel %vm548, %v482, %v580
      %v613 = vsel %vm549, %v485, %v581
      %v614 = vsel %vm550, %v490, %v582
      %v615 = vsel %vm551, %v493, %v583
      %v616 = vsel %vm552, %v498, %v584
      %v617 = vsel %vm553, %v501, %v585
      %v618 = vsel %vm554, %v506, %v586
      %v619 = vsel %vm555, %v509, %v587
      %v620 = vsel %vm556, %v514, %v588
      %v621 = vsel %vm557, %v517, %v589
      %v622 = vsel %vm558, %v522, %v590
      %v623 = vsel %vm559, %v525, %v591
      %v624 = vpack.c.bf16 %v593, %v592
      %v625 = vpack.c.bf16 %v595, %v594
      %v626 = vpack.c.bf16 %v597, %v596
      %v627 = vpack.c.bf16 %v599, %v598
      %v628 = vpack.c.bf16 %v601, %v600
      %v629 = vpack.c.bf16 %v603, %v602
      %v630 = vpack.c.bf16 %v605, %v604
      %v631 = vpack.c.bf16 %v607, %v606
      %v632 = vpack.c.bf16 %v609, %v608
      %v633 = vpack.c.bf16 %v611, %v610
      %v634 = vpack.c.bf16 %v613, %v612
      %v635 = vpack.c.bf16 %v615, %v614
      %v636 = vpack.c.bf16 %v617, %v616
      %v637 = vpack.c.bf16 %v619, %v618
      %v638 = vpack.c.bf16 %v621, %v620
      %v639 = vpack.c.bf16 %v623, %v622
      %v656 = vunpack.c.l.b16 %v624
      %v657 = vunpack.c.h.b16 %v624
      %v658 = vunpack.c.l.b16 %v625
      %v659 = vunpack.c.h.b16 %v625
      %v660 = vunpack.c.l.b16 %v626
      %v661 = vunpack.c.h.b16 %v626
      %v662 = vunpack.c.l.b16 %v627
      %v663 = vunpack.c.h.b16 %v627
      %v664 = vunpack.c.l.b16 %v628
      %v665 = vunpack.c.h.b16 %v628
      %v666 = vunpack.c.l.b16 %v629
      %v667 = vunpack.c.h.b16 %v629
      %v668 = vunpack.c.l.b16 %v630
      %v669 = vunpack.c.h.b16 %v630
      %v670 = vunpack.c.l.b16 %v631
      %v671 = vunpack.c.h.b16 %v631
      %v672 = vunpack.c.l.b16 %v632
      %v673 = vunpack.c.h.b16 %v632
      %v674 = vunpack.c.l.b16 %v633
      %v675 = vunpack.c.h.b16 %v633
      %v676 = vunpack.c.l.b16 %v634
      %v677 = vunpack.c.h.b16 %v634
      %v678 = vunpack.c.l.b16 %v635
      %v679 = vunpack.c.h.b16 %v635
      %v680 = vunpack.c.l.b16 %v636
      %v681 = vunpack.c.h.b16 %v636
      %v682 = vunpack.c.l.b16 %v637
      %v683 = vunpack.c.h.b16 %v637
      %v684 = vunpack.c.l.b16 %v638
      %v685 = vunpack.c.h.b16 %v638
      %v686 = vunpack.c.l.b16 %v639
      %v687 = vunpack.c.h.b16 %v639
      %v688 = vpack.c.b16 %v656, %v656
      %v689 = vpack.c.b16 %v657, %v657
      %v690 = vpack.c.b16 %v658, %v658
      %v691 = vpack.c.b16 %v659, %v659
      %v692 = vpack.c.b16 %v660, %v660
      %v693 = vpack.c.b16 %v661, %v661
      %v694 = vpack.c.b16 %v662, %v662
      %v695 = vpack.c.b16 %v663, %v663
      %v696 = vpack.c.b16 %v664, %v664
      %v697 = vpack.c.b16 %v665, %v665
      %v698 = vpack.c.b16 %v666, %v666
      %v699 = vpack.c.b16 %v667, %v667
      %v700 = vpack.c.b16 %v668, %v668
      %v701 = vpack.c.b16 %v669, %v669
      %v702 = vpack.c.b16 %v670, %v670
      %v703 = vpack.c.b16 %v671, %v671
      %v704 = vpack.c.b16 %v672, %v672
      %v705 = vpack.c.b16 %v673, %v673
      %v706 = vpack.c.b16 %v674, %v674
      %v707 = vpack.c.b16 %v675, %v675
      %v708 = vpack.c.b16 %v676, %v676
      %v709 = vpack.c.b16 %v677, %v677
      %v710 = vpack.c.b16 %v678, %v678
      %v711 = vpack.c.b16 %v679, %v679
      %v712 = vpack.c.b16 %v680, %v680
      %v713 = vpack.c.b16 %v681, %v681
      %v714 = vpack.c.b16 %v682, %v682
      %v715 = vpack.c.b16 %v683, %v683
      %v716 = vpack.c.b16 %v684, %v684
      %v717 = vpack.c.b16 %v685, %v685
      %v718 = vpack.c.b16 %v686, %v686
      %v719 = vpack.c.b16 %v687, %v687
      %752 = vst [vmem:[%s172] sm:$0xf] %v688
      %753 = vst [vmem:[%s172 + $0x4] sm:$0xf] %v689
      %754 = vst [vmem:[%s172 + $0x8] sm:$0xf] %v690
      %755 = vst [vmem:[%s172 + $0xc] sm:$0xf] %v691
      %756 = vst [vmem:[%s172 + $0x10] sm:$0xf] %v692
      %757 = vst [vmem:[%s172 + $0x14] sm:$0xf] %v693
      %758 = vst [vmem:[%s172 + $0x18] sm:$0xf] %v694
      %759 = vst [vmem:[%s172 + $0x1c] sm:$0xf] %v695
      %760 = vst [vmem:[%s172 + $0x20] sm:$0xf] %v696
      %761 = vst [vmem:[%s172 + $0x24] sm:$0xf] %v697
      %762 = vst [vmem:[%s172 + $0x28] sm:$0xf] %v698
      %763 = vst [vmem:[%s172 + $0x2c] sm:$0xf] %v699
      %764 = vst [vmem:[%s172 + $0x30] sm:$0xf] %v700
      %765 = vst [vmem:[%s172 + $0x34] sm:$0xf] %v701
      %766 = vst [vmem:[%s172 + $0x38] sm:$0xf] %v702
      %767 = vst [vmem:[%s172 + $0x3c] sm:$0xf] %v703
      %768 = vst [vmem:[%s172 + $0x40] sm:$0xf] %v704
      %769 = vst [vmem:[%s172 + $0x44] sm:$0xf] %v705
      %770 = vst [vmem:[%s172 + $0x48] sm:$0xf] %v706
      %771 = vst [vmem:[%s172 + $0x4c] sm:$0xf] %v707
      %772 = vst [vmem:[%s172 + $0x50] sm:$0xf] %v708
      %773 = vst [vmem:[%s172 + $0x54] sm:$0xf] %v709
      %774 = vst [vmem:[%s172 + $0x58] sm:$0xf] %v710
      %775 = vst [vmem:[%s172 + $0x5c] sm:$0xf] %v711
      %776 = vst [vmem:[%s172 + $0x60] sm:$0xf] %v712
      %777 = vst [vmem:[%s172 + $0x64] sm:$0xf] %v713
      %778 = vst [vmem:[%s172 + $0x68] sm:$0xf] %v714
      %779 = vst [vmem:[%s172 + $0x6c] sm:$0xf] %v715
      %780 = vst [vmem:[%s172 + $0x70] sm:$0xf] %v716
      %781 = vst [vmem:[%s172 + $0x74] sm:$0xf] %v717
      %782 = vst [vmem:[%s172 + $0x78] sm:$0xf] %v718
      %783 = vst [vmem:[%s172 + $0x7c] sm:$0xf] %v719
      %s784 = smul.u32 32, %s14
      %p785 = scmp.lt.s32.totalorder %s784, 63
      %s786 = scalar_select %p785, %s784, 63
      %s787 = smul.addr %s786, 4
      %s788 = scalar_lea.vmem %s3, %s787
      // Predicated region
      $region33: #{block_d_forward.4} parent=31 // pred_check
        %p789 = pneg %p100
      $region34: #{block_d_forward.4} parent=31 // pred_check_branch
        %791 = sbr.rel (%p789) target = $region36
      $region35: #{block_d_forward.4} parent=31 // pred_region
        %s792 = smul.u32 32, %s14
      $region36: #{block_d_forward.4} parent=31 // pred_fallthru
        _
    $region32: #{block_d_forward.4} parent=5 // pred_fallthru
      _
    %p793 = scmp.le.s32.totalorder 2, %s9
    // Predicated region
    $region37: #{block_d_forward.4} parent=5 // pred_check
      %p794 = pneg %p793
    $region38: #{block_d_forward.4} parent=5 // pred_check_branch
      %796 = sbr.rel (%p794) target = $region40
    $region39: #{block_d_forward.4} parent=5 // pred_region
      %s797 = ssub.s32 %s9, 2
      // Predicated region
      $region41: #{block_d_forward.4} parent=39 // pred_check
        %p798 = pneg %p106
      $region42: #{block_d_forward.4} parent=39 // pred_check_branch
        %800 = sbr.rel (%p798) target = $region44
      $region43: #{block_d_forward.4} parent=39 // pred_region
        %s801 = smul.u32 32, %s15
        %p802 = scmp.lt.s32.totalorder %s801, 63
        %s803 = scalar_select %p802, %s801, 63
        %s804 = smul.addr %s803, 4
        %s805 = scalar_lea.vmem %s3, %s804
      $region44: #{block_d_forward.4} parent=39 // pred_fallthru
        _
    $region40: #{block_d_forward.4} parent=5 // pred_fallthru
      _
  $region6: #{block_d_forward.4} parent=0 // loop_footer
    %s13 = sadd.s32 1, %s9
  $region7: #{block_d_forward.4} parent=0 // loop_footer_branch
    %8 = sbr.rel target = $region3
  $region8: #{block_d_forward.4} parent=0 // loop_exit
    _

// kernel: block_d_forward.5
$region0: #{block_d_forward.5}
  #allocation0 [shape = 'u32[]', space=smem, size = 0x4, offset = 0x4, fixed_abs, tag = 'smem constant byte address 0x4 - core index']
  #allocation1 [shape = 'u32[144,128]{1,0:T(1,128)}', space=vmem, size = 0x12000, scoped, tag = 'internal scratch']
  %s0 = inlined_call_operand.vmem [shape: bf16[128,72], index: 0, kind: input, shape index: {}]
  %s1 = inlined_call_operand.vmem [shape: bf16[72,128], index: 1, kind: input, shape index: {}]
  %s2 = inlined_call_operand.vmem [shape: f32[1,128], index: 2, kind: input, shape index: {}]
  %s3 = inlined_call_operand.vmem [shape: f32[128,128], index: 3, kind: input, shape index: {}]
  %s4 = inlined_call_operand.vmem [shape: f32[128,128], index: 4, kind: output, shape index: {}]
  %s5 = sld [smem:[#allocation0]]
  $region26: #{block_d_forward.5} parent=0
    _
  %s7 = ssub.s32 1, %s5
  %s8 = scalar_select 0, %s7, %s5
  // Predicated region
  $region2: #{block_d_forward.5} parent=0 // pred_check
    _
  $region3: #{block_d_forward.5} parent=0 // pred_check_branch
    %10 = sbr.rel (0) target = $region5
  $region4: #{block_d_forward.5} parent=0 // pred_region
    _
  $region5: #{block_d_forward.5} parent=0 // pred_fallthru
    _
  // Predicated region
  $region6: #{block_d_forward.5} parent=0 // pred_check
    _
  $region7: #{block_d_forward.5} parent=0 // pred_check_branch
    %12 = sbr.rel (0) target = $region9
  $region8: #{block_d_forward.5} parent=0 // pred_region
    _
  $region9: #{block_d_forward.5} parent=0 // pred_fallthru
    _
  // Predicated region
  $region10: #{block_d_forward.5} parent=0 // pred_check
    _
  $region11: #{block_d_forward.5} parent=0 // pred_check_branch
    %14 = sbr.rel (0) target = $region13
  $region12: #{block_d_forward.5} parent=0 // pred_region
    _
  $region13: #{block_d_forward.5} parent=0 // pred_fallthru
    _
  // Predicated region
  $region14: #{block_d_forward.5} parent=0 // pred_check
    _
  $region15: #{block_d_forward.5} parent=0 // pred_check_branch
    %16 = sbr.rel (0) target = $region17
  $region16: #{block_d_forward.5} parent=0 // pred_region
    _
  $region17: #{block_d_forward.5} parent=0 // pred_fallthru
    _
  %v18 = vld [vmem:[%s0] sm:$0xf]
  %v19 = vld [vmem:[%s0 + $0x4] sm:$0xf]
  %v20 = vld [vmem:[%s0 + $0x8] sm:$0xf]
  %v21 = vld [vmem:[%s0 + $0xc] sm:$0xf]
  %v22 = vld [vmem:[%s0 + $0x10] sm:$0xf]
  %v23 = vld [vmem:[%s0 + $0x14] sm:$0xf]
  %v24 = vld [vmem:[%s0 + $0x18] sm:$0xf]
  %v25 = vld [vmem:[%s0 + $0x1c] sm:$0xf]
  %v26 = vld [vmem:[%s0 + $0x20] sm:$0xf]
  %v27 = vld [vmem:[%s0 + $0x24] sm:$0xf]
  %v28 = vld [vmem:[%s0 + $0x28] sm:$0xf]
  %v29 = vld [vmem:[%s0 + $0x2c] sm:$0xf]
  %v30 = vld [vmem:[%s0 + $0x30] sm:$0xf]
  %v31 = vld [vmem:[%s0 + $0x34] sm:$0xf]
  %v32 = vld [vmem:[%s0 + $0x38] sm:$0xf]
  %v33 = vld [vmem:[%s0 + $0x3c] sm:$0xf]
  %v34 = vld [vmem:[%s1] sm:$0xf]
  %v35 = vld [vmem:[%s1 + $0x4] sm:$0xf]
  %v36 = vld [vmem:[%s1 + $0x8] sm:$0xf]
  %v37 = vld [vmem:[%s1 + $0xc] sm:$0xf]
  %v38 = vld [vmem:[%s1 + $0x10] sm:$0xf]
  %v39 = vld [vmem:[%s1 + $0x14] sm:$0xf]
  %v40 = vld [vmem:[%s1 + $0x18] sm:$0xf]
  %v41 = vld [vmem:[%s1 + $0x1c] sm:$0xf]
  %v42 = vld [vmem:[%s1 + $0x20] sm:$0xf]
  %v43 = vld [vmem:[%s2] sm:$0x1]
  %v45 = vlaneseq
  %v46 = vshrl.u32 %v45, 7
  %v47 = vsub.s32 0, %v46
  %v48 = vrot.slane %v43, %v47
  %v66 = vunpack.c.l.b16 %v18
  %v67 = vunpack.c.l.b16 %v19
  %v68 = vunpack.c.l.b16 %v20
  %v69 = vunpack.c.l.b16 %v21
  %v70 = vunpack.c.l.b16 %v22
  %v71 = vunpack.c.l.b16 %v23
  %v72 = vunpack.c.l.b16 %v24
  %v73 = vunpack.c.l.b16 %v25
  %v74 = vunpack.c.l.b16 %v26
  %v75 = vunpack.c.l.b16 %v27
  %v76 = vunpack.c.l.b16 %v28
  %v77 = vunpack.c.l.b16 %v29
  %v78 = vunpack.c.l.b16 %v30
  %v79 = vunpack.c.l.b16 %v31
  %v80 = vunpack.c.l.b16 %v32
  %v81 = vunpack.c.l.b16 %v33
  %v82 = vpack.c.b16 %v67, %v66
  %v83 = vpack.c.b16 %v69, %v68
  %v84 = vpack.c.b16 %v71, %v70
  %v85 = vpack.c.b16 %v73, %v72
  %v86 = vpack.c.b16 %v75, %v74
  %v87 = vpack.c.b16 %v77, %v76
  %v88 = vpack.c.b16 %v79, %v78
  %v89 = vpack.c.b16 %v81, %v80
  %v99 = vunpack.c.l.b16 %v34
  %v100 = vunpack.c.l.b16 %v35
  %v101 = vunpack.c.l.b16 %v36
  %v102 = vunpack.c.l.b16 %v37
  %v103 = vunpack.c.l.b16 %v38
  %v104 = vunpack.c.l.b16 %v39
  %v105 = vunpack.c.l.b16 %v40
  %v106 = vunpack.c.l.b16 %v41
  %v107 = vunpack.c.l.b16 %v42
  %v108 = vpack.c.b16 %v100, %v99
  %v109 = vpack.c.b16 %v102, %v101
  %v110 = vpack.c.b16 %v104, %v103
  %v111 = vpack.c.b16 %v106, %v105
  %v112 = vpack.c.b16 %v107, %v107
  %vm117 = vcmask 588800
  %v119 = vsel %vm117, %v82, 0
  %v122 = vsel %vm117, %v83, 0
  %v125 = vsel %vm117, %v84, 0
  %v128 = vsel %vm117, %v85, 0
  %v131 = vsel %vm117, %v86, 0
  %v134 = vsel %vm117, %v87, 0
  %v137 = vsel %vm117, %v88, 0
  %v140 = vsel %vm117, %v89, 0
  %vm142 = vcmask 1043456
  %v144 = vsel %vm142, %v112, 0
  %146 = vmatprep.subr.bf16.mxu0 0
  %147 = vmatpush1.bf16.msra.mxu0 %v108
  %148 = vmatprep.subr.bf16.mxu0 0
  %149 = vmatpush1.bf16.msra.mxu0 %v109
  %150 = vmatprep.subr.bf16.mxu0 0
  %151 = vmatpush1.bf16.msra.mxu0 %v110
  %152 = vmatprep.subr.bf16.mxu0 0
  %153 = vmatpush1.bf16.msra.mxu0 %v111
  %154 = vmatprep.subr.bf16.mxu0 0
  %155 = vmatpush1.bf16.msra.mxu0 %v144
  %156 = vmatprep.subr.bf16.mxu0 0
  %157 = vmatpush1.bf16.msra.mxu0 0
  %158 = vmatprep.subr.bf16.mxu0 0
  %159 = vmatpush1.bf16.msra.mxu0 0
  %160 = vmatprep.subr.bf16.mxu0 0
  %161 = vmatpush1.bf16.msra.mxu0 0
  %162 = vmatprep.subr.bf16.mxu0 0
  %163 = vmatpush1.bf16.msra.mxu0 0
  %164 = vmatprep.subr.bf16.mxu0 0
  %165 = vmatpush1.bf16.msra.mxu0 0
  %166 = vmatprep.subr.bf16.mxu0 0
  %167 = vmatpush1.bf16.msra.mxu0 0
  %168 = vmatprep.subr.bf16.mxu0 0
  %169 = vmatpush1.bf16.msra.mxu0 0
  %170 = vmatprep.subr.bf16.mxu0 0
  %171 = vmatpush1.bf16.msra.mxu0 0
  %172 = vmatprep.subr.bf16.mxu0 0
  %173 = vmatpush1.bf16.msra.mxu0 0
  %174 = vmatprep.subr.bf16.mxu0 0
  %175 = vmatpush1.bf16.msra.mxu0 0
  %176 = vmatprep.subr.bf16.mxu0 0
  %177 = vmatpush1.bf16.msra.mxu0 0
  %178 = vmatprep.mubr.bf16.mxu0 0
  %179 = vmatmul.mubr.bf16.gmra.mrb[0].mxu0 %v119
  %v180 = vpop.f32.mrb[0].mxu0
  %v181 = vadd.f32 %v48, %v180
  %v182 = vpop.f32.mrb[0].mxu0
  %v183 = vpop.f32.mrb[0].mxu0
  %v184 = vadd.f32 %v48, %v183
  %v185 = vpop.f32.mrb[0].mxu0
  %186 = vmatprep.mubr.bf16.mxu0 0
  %187 = vmatmul.mubr.bf16.gmra.mrb[0].mxu0 %v122
  %v188 = vpop.f32.mrb[0].mxu0
  %v189 = vadd.f32 %v48, %v188
  %v190 = vpop.f32.mrb[0].mxu0
  %v191 = vpop.f32.mrb[0].mxu0
  %v192 = vadd.f32 %v48, %v191
  %v193 = vpop.f32.mrb[0].mxu0
  %194 = vmatprep.mubr.bf16.mxu0 0
  %195 = vmatmul.mubr.bf16.gmra.mrb[0].mxu0 %v125
  %v196 = vpop.f32.mrb[0].mxu0
  %v197 = vadd.f32 %v48, %v196
  %v198 = vpop.f32.mrb[0].mxu0
  %v199 = vpop.f32.mrb[0].mxu0
  %v200 = vadd.f32 %v48, %v199
  %v201 = vpop.f32.mrb[0].mxu0
  %202 = vmatprep.mubr.bf16.mxu0 0
  %203 = vmatmul.mubr.bf16.gmra.mrb[0].mxu0 %v128
  %v204 = vpop.f32.mrb[0].mxu0
  %v205 = vadd.f32 %v48, %v204
  %v206 = vpop.f32.mrb[0].mxu0
  %v207 = vpop.f32.mrb[0].mxu0
  %v208 = vadd.f32 %v48, %v207
  %v209 = vpop.f32.mrb[0].mxu0
  %210 = vmatprep.mubr.bf16.mxu0 0
  %211 = vmatmul.mubr.bf16.gmra.mrb[0].mxu0 %v131
  %v212 = vpop.f32.mrb[0].mxu0
  %v213 = vadd.f32 %v48, %v212
  %v214 = vpop.f32.mrb[0].mxu0
  %v215 = vpop.f32.mrb[0].mxu0
  %v216 = vadd.f32 %v48, %v215
  %v217 = vpop.f32.mrb[0].mxu0
  %218 = vmatprep.mubr.bf16.mxu0 0
  %219 = vmatmul.mubr.bf16.gmra.mrb[0].mxu0 %v134
  %v220 = vpop.f32.mrb[0].mxu0
  %v221 = vadd.f32 %v48, %v220
  %v222 = vpop.f32.mrb[0].mxu0
  %v223 = vpop.f32.mrb[0].mxu0
  %v224 = vadd.f32 %v48, %v223
  %v225 = vpop.f32.mrb[0].mxu0
  %226 = vmatprep.mubr.bf16.mxu0 0
  %227 = vmatmul.mubr.bf16.gmra.mrb[0].mxu0 %v137
  %v228 = vpop.f32.mrb[0].mxu0
  %v229 = vadd.f32 %v48, %v228
  %v230 = vpop.f32.mrb[0].mxu0
  %v231 = vpop.f32.mrb[0].mxu0
  %v232 = vadd.f32 %v48, %v231
  %v233 = vpop.f32.mrb[0].mxu0
  %234 = vmatprep.mubr.bf16.mxu0 0
  %235 = vmatmul.mubr.bf16.gmra.mrb[0].mxu0 %v140
  %v236 = vpop.f32.mrb[0].mxu0
  %v237 = vadd.f32 %v48, %v236
  %v238 = vpop.f32.mrb[0].mxu0
  %v239 = vpop.f32.mrb[0].mxu0
  %v240 = vadd.f32 %v48, %v239
  %v241 = vpop.f32.mrb[0].mxu0
  %242 = vdwg.mxu0
  %vm243 = vcmp.gt.f32.partialorder %v181, 0.0
  %vm244 = vcmp.gt.f32.partialorder %v184, 0.0
  %vm245 = vcmp.gt.f32.partialorder %v189, 0.0
  %vm246 = vcmp.gt.f32.partialorder %v192, 0.0
  %vm247 = vcmp.gt.f32.partialorder %v197, 0.0
  %vm248 = vcmp.gt.f32.partialorder %v200, 0.0
  %vm249 = vcmp.gt.f32.partialorder %v205, 0.0
  %vm250 = vcmp.gt.f32.partialorder %v208, 0.0
  %vm251 = vcmp.gt.f32.partialorder %v213, 0.0
  %vm252 = vcmp.gt.f32.partialorder %v216, 0.0
  %vm253 = vcmp.gt.f32.partialorder %v221, 0.0
  %vm254 = vcmp.gt.f32.partialorder %v224, 0.0
  %vm255 = vcmp.gt.f32.partialorder %v229, 0.0
  %vm256 = vcmp.gt.f32.partialorder %v232, 0.0
  %vm257 = vcmp.gt.f32.partialorder %v237, 0.0
  %vm258 = vcmp.gt.f32.partialorder %v240, 0.0
  %v259 = vmul.f32 %v181, 0.2
  %v260 = vmul.f32 %v184, 0.2
  %v261 = vmul.f32 %v189, 0.2
  %v262 = vmul.f32 %v192, 0.2
  %v263 = vmul.f32 %v197, 0.2
  %v264 = vmul.f32 %v200, 0.2
  %v265 = vmul.f32 %v205, 0.2
  %v266 = vmul.f32 %v208, 0.2
  %v267 = vmul.f32 %v213, 0.2
  %v268 = vmul.f32 %v216, 0.2
  %v269 = vmul.f32 %v221, 0.2
  %v270 = vmul.f32 %v224, 0.2
  %v271 = vmul.f32 %v229, 0.2
  %v272 = vmul.f32 %v232, 0.2
  %v273 = vmul.f32 %v237, 0.2
  %v274 = vmul.f32 %v240, 0.2
  %v275 = vsel %vm243, %v181, %v259
  %v276 = vsel %vm244, %v184, %v260
  %v277 = vsel %vm245, %v189, %v261
  %v278 = vsel %vm246, %v192, %v262
  %v279 = vsel %vm247, %v197, %v263
  %v280 = vsel %vm248, %v200, %v264
  %v281 = vsel %vm249, %v205, %v265
  %v282 = vsel %vm250, %v208, %v266
  %v283 = vsel %vm251, %v213, %v267
  %v284 = vsel %vm252, %v216, %v268
  %v285 = vsel %vm253, %v221, %v269
  %v286 = vsel %vm254, %v224, %v270
  %v287 = vsel %vm255, %v229, %v271
  %v288 = vsel %vm256, %v232, %v272
  %v289 = vsel %vm257, %v237, %v273
  %v290 = vsel %vm258, %v240, %v274
  %v291 = vld [vmem:[%s3] sm:$0xff]
  %v292 = vld [vmem:[%s3 + $0x8] sm:$0xff]
  %v293 = vld [vmem:[%s3 + $0x10] sm:$0xff]
  %v294 = vld [vmem:[%s3 + $0x18] sm:$0xff]
  %v295 = vld [vmem:[%s3 + $0x20] sm:$0xff]
  %v296 = vld [vmem:[%s3 + $0x28] sm:$0xff]
  %v297 = vld [vmem:[%s3 + $0x30] sm:$0xff]
  %v298 = vld [vmem:[%s3 + $0x38] sm:$0xff]
  %v299 = vld [vmem:[%s3 + $0x40] sm:$0xff]
  %v300 = vld [vmem:[%s3 + $0x48] sm:$0xff]
  %v301 = vld [vmem:[%s3 + $0x50] sm:$0xff]
  %v302 = vld [vmem:[%s3 + $0x58] sm:$0xff]
  %v303 = vld [vmem:[%s3 + $0x60] sm:$0xff]
  %v304 = vld [vmem:[%s3 + $0x68] sm:$0xff]
  %v305 = vld [vmem:[%s3 + $0x70] sm:$0xff]
  %v306 = vld [vmem:[%s3 + $0x78] sm:$0xff]
  %v307 = vadd.f32 %v275, %v291
  %v308 = vadd.f32 %v276, %v292
  %v309 = vadd.f32 %v277, %v293
  %v310 = vadd.f32 %v278, %v294
  %v311 = vadd.f32 %v279, %v295
  %v312 = vadd.f32 %v280, %v296
  %v313 = vadd.f32 %v281, %v297
  %v314 = vadd.f32 %v282, %v298
  %v315 = vadd.f32 %v283, %v299
  %v316 = vadd.f32 %v284, %v300
  %v317 = vadd.f32 %v285, %v301
  %v318 = vadd.f32 %v286, %v302
  %v319 = vadd.f32 %v287, %v303
  %v320 = vadd.f32 %v288, %v304
  %v321 = vadd.f32 %v289, %v305
  %v322 = vadd.f32 %v290, %v306
  %323 = vst [vmem:[%s4] sm:$0xff] %v307
  %324 = vst [vmem:[%s4 + $0x8] sm:$0xff] %v308
  %325 = vst [vmem:[%s4 + $0x10] sm:$0xff] %v309
  %326 = vst [vmem:[%s4 + $0x18] sm:$0xff] %v310
  %327 = vst [vmem:[%s4 + $0x20] sm:$0xff] %v311
  %328 = vst [vmem:[%s4 + $0x28] sm:$0xff] %v312
  %329 = vst [vmem:[%s4 + $0x30] sm:$0xff] %v313
  %330 = vst [vmem:[%s4 + $0x38] sm:$0xff] %v314
  %331 = vst [vmem:[%s4 + $0x40] sm:$0xff] %v315
  %332 = vst [vmem:[%s4 + $0x48] sm:$0xff] %v316
  %333 = vst [vmem:[%s4 + $0x50] sm:$0xff] %v317
  %334 = vst [vmem:[%s4 + $0x58] sm:$0xff] %v318
  %335 = vst [vmem:[%s4 + $0x60] sm:$0xff] %v319
  %336 = vst [vmem:[%s4 + $0x68] sm:$0xff] %v320
  %337 = vst [vmem:[%s4 + $0x70] sm:$0xff] %v321
  %338 = vst [vmem:[%s4 + $0x78] sm:$0xff] %v322
  // Predicated region
  $region18: #{block_d_forward.5} parent=0 // pred_check
    _
  $region19: #{block_d_forward.5} parent=0 // pred_check_branch
    %340 = sbr.rel (0) target = $region21
  $region20: #{block_d_forward.5} parent=0 // pred_region
    _
  $region21: #{block_d_forward.5} parent=0 // pred_fallthru
    _
  // Predicated region
  $region22: #{block_d_forward.5} parent=0 // pred_check
    _
  $region23: #{block_d_forward.5} parent=0 // pred_check_branch
    %342 = sbr.rel (0) target = $region25
  $region24: #{block_d_forward.5} parent=0 // pred_region
    _
  $region25: #{block_d_forward.5} parent=0 // pred_fallthru
    _

</llo_original>
